<compile_context>
chip_gen: v5e
topology: v5e:2x2
jax: 0.10.0
libtpu: 0.0.40
codegen_flags: <defaults>
</compile_context>

<pallas_src>
import jax
import jax.numpy as jnp
from jax.experimental import pallas as pl
from jax.experimental.pallas import tpu as pltpu

_VMEM_LIMIT = 64 * 1024 * 1024  # raise scoped-VMEM limit (headroom for larger D)


def _pick_t_blk(s, target=16):
    """Largest divisor of s that is <= target (timesteps per grid step)."""
    t = min(s, target)
    while s % t:
        t -= 1
    return t


# ----------------------------- LSTM layer kernel -----------------------------
def _lstm_layer_kernel(gi_ref, whh_ref, o_ref, h_sc, c_sc):
    # gi_ref : (T_blk, 4, B, D) f32  precomputed x@Wih^T + (bih+bhh), per-gate (i,f,g,o)
    # whh_ref: (4, D, D)       bf16  per-gate transposed recurrent weights
    # o_ref  : (T_blk, B, D)
    @pl.when(pl.program_id(0) == 0)
    def _():
        h_sc[...] = jnp.zeros_like(h_sc)
        c_sc[...] = jnp.zeros_like(c_sc)

    h = h_sc[...]
    c = c_sc[...]
    t_blk = o_ref.shape[0]
    for j in range(t_blk):  # static, fully-unrolled loop over the time block
        hb = h.astype(jnp.bfloat16)
        gh_i = jnp.dot(hb, whh_ref[0], preferred_element_type=jnp.float32)
        gh_f = jnp.dot(hb, whh_ref[1], preferred_element_type=jnp.float32)
        gh_g = jnp.dot(hb, whh_ref[2], preferred_element_type=jnp.float32)
        gh_o = jnp.dot(hb, whh_ref[3], preferred_element_type=jnp.float32)
        i = jax.nn.sigmoid(gi_ref[j, 0] + gh_i)
        f = jax.nn.sigmoid(gi_ref[j, 1] + gh_f)
        g = jnp.tanh(gi_ref[j, 2] + gh_g)
        o = jax.nn.sigmoid(gi_ref[j, 3] + gh_o)
        c = f * c + i * g
        h = o * jnp.tanh(c)
        o_ref[j] = h.astype(o_ref.dtype)
    h_sc[...] = h
    c_sc[...] = c


def _run_lstm_layer(x_tmaj, wih_t, whh_g, bias):
    # x_tmaj: (S, B, D) f32; wih_t: (D, 4D) bf16; whh_g: (4, D, D) bf16; bias: (4D,) f32
    s, b, d = x_tmaj.shape
    # Hoisted time-parallel input projection: one big MXU matmul over all timesteps.
    gi = jnp.dot(x_tmaj.reshape(s * b, d).astype(jnp.bfloat16), wih_t,
                 preferred_element_type=jnp.float32) + bias          # (S*B, 4D) f32
    gi = jnp.transpose(gi.reshape(s, b, 4, d), (0, 2, 1, 3))          # (S, 4, B, D)

    t_blk = _pick_t_blk(s)
    return pl.pallas_call(
        _lstm_layer_kernel,
        out_shape=jax.ShapeDtypeStruct((s, b, d), x_tmaj.dtype),
        grid_spec=pltpu.PrefetchScalarGridSpec(
            num_scalar_prefetch=0,
            grid=(s // t_blk,),
            in_specs=[
                pl.BlockSpec((t_blk, 4, b, d), lambda t: (t, 0, 0, 0)),
                pl.BlockSpec((4, d, d), lambda t: (0, 0, 0)),
            ],
            out_specs=pl.BlockSpec((t_blk, b, d), lambda t: (t, 0, 0)),
            scratch_shapes=[
                pltpu.VMEM((b, d), jnp.float32),   # h
                pltpu.VMEM((b, d), jnp.float32),   # c
            ],
        ),
        compiler_params=pltpu.CompilerParams(
            dimension_semantics=("arbitrary",),
            vmem_limit_bytes=_VMEM_LIMIT),
    )(gi, whh_g)


# ----------------------------- GRU layer kernel ------------------------------
def _gru_layer_kernel(gi_ref, whh_ref, bhh_ref, o_ref, h_sc):
    # gi_ref : (T_blk, 3, B, D) f32  precomputed x@Wih^T + bih, per-gate (r,z,n)
    # whh_ref: (3, D, D)       bf16  per-gate transposed recurrent weights
    # bhh_ref: (3, 1, D)       f32
    # o_ref  : (T_blk, B, D)
    @pl.when(pl.program_id(0) == 0)
    def _():
        h_sc[...] = jnp.zeros_like(h_sc)

    h = h_sc[...]
    t_blk = o_ref.shape[0]
    for j in range(t_blk):
        hb = h.astype(jnp.bfloat16)
        gh_r = jnp.dot(hb, whh_ref[0], preferred_element_type=jnp.float32) + bhh_ref[0]
        gh_z = jnp.dot(hb, whh_ref[1], preferred_element_type=jnp.float32) + bhh_ref[1]
        gh_n = jnp.dot(hb, whh_ref[2], preferred_element_type=jnp.float32) + bhh_ref[2]
        r = jax.nn.sigmoid(gi_ref[j, 0] + gh_r)
        z = jax.nn.sigmoid(gi_ref[j, 1] + gh_z)
        n = jnp.tanh(gi_ref[j, 2] + r * gh_n)
        h = (1.0 - z) * n + z * h
        o_ref[j] = h.astype(o_ref.dtype)
    h_sc[...] = h


def _run_gru_layer(x_tmaj, wih_t, whh_g, bih, bhh_g):
    # x_tmaj: (S, B, D) f32; wih_t: (D, 3D) bf16; whh_g: (3, D, D) bf16
    # bih: (3D,) f32; bhh_g: (3, 1, D) f32
    s, b, d = x_tmaj.shape
    gi = jnp.dot(x_tmaj.reshape(s * b, d).astype(jnp.bfloat16), wih_t,
                 preferred_element_type=jnp.float32) + bih            # (S*B, 3D) f32
    gi = jnp.transpose(gi.reshape(s, b, 3, d), (0, 2, 1, 3))           # (S, 3, B, D)

    t_blk = _pick_t_blk(s)
    return pl.pallas_call(
        _gru_layer_kernel,
        out_shape=jax.ShapeDtypeStruct((s, b, d), x_tmaj.dtype),
        grid_spec=pltpu.PrefetchScalarGridSpec(
            num_scalar_prefetch=0,
            grid=(s // t_blk,),
            in_specs=[
                pl.BlockSpec((t_blk, 3, b, d), lambda t: (t, 0, 0, 0)),
                pl.BlockSpec((3, d, d), lambda t: (0, 0, 0)),
                pl.BlockSpec((3, 1, d), lambda t: (0, 0, 0)),
            ],
            out_specs=pl.BlockSpec((t_blk, b, d), lambda t: (t, 0, 0)),
            scratch_shapes=[
                pltpu.VMEM((b, d), jnp.float32),   # h
            ],
        ),
        compiler_params=pltpu.CompilerParams(
            dimension_semantics=("arbitrary",),
            vmem_limit_bytes=_VMEM_LIMIT),
    )(gi, whh_g, bhh_g)


# ------------------------------ module wrapper --------------------------------
class RNNSequenceEncoderPallas:
    """Pallas equivalent of RNNSequenceEncoderModule (forward only, dropout=0)."""

    def __init__(self, rnn_type_name, num_layers, dim, dropout=0, key=None):
        assert rnn_type_name in ("LSTM", "GRU")
        self.rnn_type = rnn_type_name
        self.num_layers = num_layers
        self.dim = dim
        n_gates = 4 if rnn_type_name == "LSTM" else 3
        if key is None:
            key = jax.random.PRNGKey(0)
        bound = 1.0 / jnp.sqrt(jnp.float32(dim))

        self.params = []        # f32 PyTorch-layout params (used by the reference)
        self.layer_params = []  # precomputed kernel-layout params (transposed, bf16, per-gate)
        for _ in range(num_layers):
            key, k1, k2, k3, k4 = jax.random.split(key, 5)
            wih = jax.random.uniform(k1, (n_gates * dim, dim), jnp.float32, -bound, bound)
            whh = jax.random.uniform(k2, (n_gates * dim, dim), jnp.float32, -bound, bound)
            bih = jax.random.uniform(k3, (n_gates * dim,), jnp.float32, -bound, bound)
            bhh = jax.random.uniform(k4, (n_gates * dim,), jnp.float32, -bound, bound)
            self.params.append((wih, whh, bih, bhh))

            # One-time weight preparation (no per-call transposes):
            wih_t = wih.T.astype(jnp.bfloat16)                                     # (D, nG*D)
            whh_g = jnp.transpose(whh.T.reshape(dim, n_gates, dim),
                                  (1, 0, 2)).astype(jnp.bfloat16)                  # (nG, D, D)
            if rnn_type_name == "LSTM":
                self.layer_params.append((wih_t, whh_g, (bih + bhh).astype(jnp.float32)))
            else:
                self.layer_params.append((wih_t, whh_g, bih.astype(jnp.float32),
                                          bhh.reshape(n_gates, 1, dim).astype(jnp.float32)))

    def __call__(self, x):
        # x: (batch, seq, dim) — batch_first, matches the PyTorch module.
        xt = jnp.transpose(x, (1, 0, 2)).astype(jnp.float32)   # -> (seq, batch, dim)
        for p in self.layer_params:
            if self.rnn_type == "LSTM":
                xt = _run_lstm_layer(xt, *p)
            else:
                xt = _run_gru_layer(xt, *p)
        return jnp.transpose(xt, (1, 0, 2))                    # -> (batch, seq, dim)


# ------------------------------ pure-JAX f32 reference -------------------------
def _ref_forward(rnn_type, x, params):
    b, s, d = x.shape
    out = x
    for (wih, whh, bih, bhh) in params:
        xs = jnp.transpose(out, (1, 0, 2))  # (S, B, D)
        if rnn_type == "LSTM":
            def step(carry, xt):
                h, c = carry
                g = xt @ wih.T + bih + h @ whh.T + bhh
                i = jax.nn.sigmoid(g[:, :d])
                f = jax.nn.sigmoid(g[:, d:2 * d])
                gg = jnp.tanh(g[:, 2 * d:3 * d])
                o = jax.nn.sigmoid(g[:, 3 * d:])
                c = f * c + i * gg
                h = o * jnp.tanh(c)
                return (h, c), h
            (_, _), ys = jax.lax.scan(step, (jnp.zeros((b, d)), jnp.zeros((b, d))), xs)
        else:
            def step(h, xt):
                gi = xt @ wih.T + bih
                gh = h @ whh.T + bhh
                r = jax.nn.sigmoid(gi[:, :d] + gh[:, :d])
                z = jax.nn.sigmoid(gi[:, d:2 * d] + gh[:, d:2 * d])
                n = jnp.tanh(gi[:, 2 * d:] + r * gh[:, 2 * d:])
                h = (1.0 - z) * n + z * h
                return h, h
            _, ys = jax.lax.scan(step, jnp.zeros((b, d)), xs)
        out = jnp.transpose(ys, (1, 0, 2))
    return out


if __name__ == "__main__":
    batch, seq, dim, num_layers = 2, 8, 32, 2
    key = jax.random.PRNGKey(0)
    kx, kp_lstm, kp_gru = jax.random.split(key, 3)
    x = jax.random.normal(kx, (batch, seq, dim), jnp.float32)

    ok = True
    for rnn_type, kp in (("LSTM", kp_lstm), ("GRU", kp_gru)):
        model = RNNSequenceEncoderPallas(rnn_type, num_layers, dim, key=kp)
        y = jax.block_until_ready(model(x))
        y_ref = jax.block_until_ready(_ref_forward(rnn_type, x, model.params))
        assert y.shape == (batch, seq, dim)
        # bf16 MXU matmuls (f32 accumulation / f32 gates) vs pure-f32 reference:
        # loosened tolerance per review.
        if not jnp.allclose(y, y_ref, atol=5e-2, rtol=5e-2):
            ok = False
    if ok:
        print("KERNEL_OK")
</pallas_src>

<mosaic_0001>
module attributes {stable_mosaic.version = 11 : i64} {
  func.func @_lstm_layer_kernel(%arg0: i32, %arg1: memref<8x4x2x32xf32, #tpu.memory_space<vmem>>, %arg2: memref<4x32x32xbf16, #tpu.memory_space<vmem>>, %arg3: memref<8x2x32xf32, #tpu.memory_space<vmem>>, %arg4: memref<2x32xf32, #tpu.memory_space<vmem>>, %arg5: memref<2x32xf32, #tpu.memory_space<vmem>>) attributes {dimension_semantics = [#tpu.dimension_semantics<arbitrary>], iteration_bounds = array<i64: 1>, scalar_prefetch = 0 : i64, scratch_operands = 2 : i64, tpu.core_type = #tpu.core_type<tc>, window_params = [{transform_indices = @transform_0, window_bounds = array<i64: 8, 4, 2, 32>}, {pipeline_mode = #tpu.pipeline_mode<synchronous>, transform_indices = @transform_1, window_bounds = array<i64: 4, 32, 32>}, {transform_indices = @transform_2, window_bounds = array<i64: 8, 2, 32>}]} {
    %c0_i32 = arith.constant 0 : i32
    %0 = arith.cmpi eq, %arg0, %c0_i32 : i32
    %1 = arith.extui %0 : i1 to i32
    %c0_i32_0 = arith.constant 0 : i32
    %2 = arith.cmpi ne, %1, %c0_i32_0 : i32
    scf.if %2 {
      %cst_304 = arith.constant 0.000000e+00 : f32
      %399 = vector.broadcast %cst_304 : f32 to vector<2x32xf32>
      %c0_305 = arith.constant 0 : index
      %c0_306 = arith.constant 0 : index
      %400 = vector.load %arg4[%c0_305, %c0_306] : memref<2x32xf32, #tpu.memory_space<vmem>>, vector<2x32xf32>
      tpu.vector_store %arg4[%c0_305, %c0_306], %399 {strides = array<i32>} : memref<2x32xf32, #tpu.memory_space<vmem>>, vector<2x32xf32>,
      %cst_307 = arith.constant 0.000000e+00 : f32
      %401 = vector.broadcast %cst_307 : f32 to vector<2x32xf32>
      %c0_308 = arith.constant 0 : index
      %c0_309 = arith.constant 0 : index
      %402 = vector.load %arg5[%c0_308, %c0_309] : memref<2x32xf32, #tpu.memory_space<vmem>>, vector<2x32xf32>
      tpu.vector_store %arg5[%c0_308, %c0_309], %401 {strides = array<i32>} : memref<2x32xf32, #tpu.memory_space<vmem>>, vector<2x32xf32>,
    } else {
    }
    %c0 = arith.constant 0 : index
    %c0_1 = arith.constant 0 : index
    %3 = vector.load %arg4[%c0, %c0_1] : memref<2x32xf32, #tpu.memory_space<vmem>>, vector<2x32xf32>
    %c0_2 = arith.constant 0 : index
    %c0_3 = arith.constant 0 : index
    %4 = vector.load %arg5[%c0_2, %c0_3] : memref<2x32xf32, #tpu.memory_space<vmem>>, vector<2x32xf32>
    %5 = arith.truncf %3 : vector<2x32xf32> to vector<2x32xbf16>
    %c0_4 = arith.constant 0 : index
    %c0_5 = arith.constant 0 : index
    %c0_6 = arith.constant 0 : index
    %6 = vector.load %arg2[%c0_4, %c0_5, %c0_6] : memref<4x32x32xbf16, #tpu.memory_space<vmem>>, vector<1x32x32xbf16>
    %7 = vector.shape_cast %6 : vector<1x32x32xbf16> to vector<32x32xbf16>
    %cst = arith.constant dense<0.000000e+00> : vector<2x32xf32>
    %8 = tpu.matmul %5, %7, %cst {dimension_numbers = #tpu.dot_dimension_numbers<[1], [0], [0], [1], [0, 0, 1, 1], [], []>} : vector<2x32xbf16>, vector<32x32xbf16>, vector<2x32xf32> -> vector<2x32xf32>
    %c1 = arith.constant 1 : index
    %c0_7 = arith.constant 0 : index
    %c0_8 = arith.constant 0 : index
    %9 = vector.load %arg2[%c1, %c0_7, %c0_8] : memref<4x32x32xbf16, #tpu.memory_space<vmem>>, vector<1x32x32xbf16>
    %10 = vector.shape_cast %9 : vector<1x32x32xbf16> to vector<32x32xbf16>
    %cst_9 = arith.constant dense<0.000000e+00> : vector<2x32xf32>
    %11 = tpu.matmul %5, %10, %cst_9 {dimension_numbers = #tpu.dot_dimension_numbers<[1], [0], [0], [1], [0, 0, 1, 1], [], []>} : vector<2x32xbf16>, vector<32x32xbf16>, vector<2x32xf32> -> vector<2x32xf32>
    %c2 = arith.constant 2 : index
    %c0_10 = arith.constant 0 : index
    %c0_11 = arith.constant 0 : index
    %12 = vector.load %arg2[%c2, %c0_10, %c0_11] : memref<4x32x32xbf16, #tpu.memory_space<vmem>>, vector<1x32x32xbf16>
    %13 = vector.shape_cast %12 : vector<1x32x32xbf16> to vector<32x32xbf16>
    %cst_12 = arith.constant dense<0.000000e+00> : vector<2x32xf32>
    %14 = tpu.matmul %5, %13, %cst_12 {dimension_numbers = #tpu.dot_dimension_numbers<[1], [0], [0], [1], [0, 0, 1, 1], [], []>} : vector<2x32xbf16>, vector<32x32xbf16>, vector<2x32xf32> -> vector<2x32xf32>
    %c3 = arith.constant 3 : index
    %c0_13 = arith.constant 0 : index
    %c0_14 = arith.constant 0 : index
    %15 = vector.load %arg2[%c3, %c0_13, %c0_14] : memref<4x32x32xbf16, #tpu.memory_space<vmem>>, vector<1x32x32xbf16>
    %16 = vector.shape_cast %15 : vector<1x32x32xbf16> to vector<32x32xbf16>
    %cst_15 = arith.constant dense<0.000000e+00> : vector<2x32xf32>
    %17 = tpu.matmul %5, %16, %cst_15 {dimension_numbers = #tpu.dot_dimension_numbers<[1], [0], [0], [1], [0, 0, 1, 1], [], []>} : vector<2x32xbf16>, vector<32x32xbf16>, vector<2x32xf32> -> vector<2x32xf32>
    %c0_16 = arith.constant 0 : index
    %c0_17 = arith.constant 0 : index
    %c0_18 = arith.constant 0 : index
    %c0_19 = arith.constant 0 : index
    %18 = vector.load %arg1[%c0_16, %c0_17, %c0_18, %c0_19] : memref<8x4x2x32xf32, #tpu.memory_space<vmem>>, vector<1x1x2x32xf32>
    %19 = vector.shape_cast %18 : vector<1x1x2x32xf32> to vector<2x32xf32>
    %20 = arith.addf %19, %8 : vector<2x32xf32>
    %21 = arith.negf %20 : vector<2x32xf32>
    %22 = math.exp %21 : vector<2x32xf32>
    %cst_20 = arith.constant 1.000000e+00 : f32
    %23 = vector.broadcast %cst_20 : f32 to vector<2x32xf32>
    %24 = arith.addf %23, %22 : vector<2x32xf32>
    %25 = arith.divf %23, %24 : vector<2x32xf32>
    %c0_21 = arith.constant 0 : index
    %c1_22 = arith.constant 1 : index
    %c0_23 = arith.constant 0 : index
    %c0_24 = arith.constant 0 : index
    %26 = vector.load %arg1[%c0_21, %c1_22, %c0_23, %c0_24] : memref<8x4x2x32xf32, #tpu.memory_space<vmem>>, vector<1x1x2x32xf32>
    %27 = vector.shape_cast %26 : vector<1x1x2x32xf32> to vector<2x32xf32>
    %28 = arith.addf %27, %11 : vector<2x32xf32>
    %29 = arith.negf %28 : vector<2x32xf32>
    %30 = math.exp %29 : vector<2x32xf32>
    %cst_25 = arith.constant 1.000000e+00 : f32
    %31 = vector.broadcast %cst_25 : f32 to vector<2x32xf32>
    %32 = arith.addf %31, %30 : vector<2x32xf32>
    %33 = arith.divf %31, %32 : vector<2x32xf32>
    %c0_26 = arith.constant 0 : index
    %c2_27 = arith.constant 2 : index
    %c0_28 = arith.constant 0 : index
    %c0_29 = arith.constant 0 : index
    %34 = vector.load %arg1[%c0_26, %c2_27, %c0_28, %c0_29] : memref<8x4x2x32xf32, #tpu.memory_space<vmem>>, vector<1x1x2x32xf32>
    %35 = vector.shape_cast %34 : vector<1x1x2x32xf32> to vector<2x32xf32>
    %36 = arith.addf %35, %14 : vector<2x32xf32>
    %37 = math.tanh %36 : vector<2x32xf32>
    %c0_30 = arith.constant 0 : index
    %c3_31 = arith.constant 3 : index
    %c0_32 = arith.constant 0 : index
    %c0_33 = arith.constant 0 : index
    %38 = vector.load %arg1[%c0_30, %c3_31, %c0_32, %c0_33] : memref<8x4x2x32xf32, #tpu.memory_space<vmem>>, vector<1x1x2x32xf32>
    %39 = vector.shape_cast %38 : vector<1x1x2x32xf32> to vector<2x32xf32>
    %40 = arith.addf %39, %17 : vector<2x32xf32>
    %41 = arith.negf %40 : vector<2x32xf32>
    %42 = math.exp %41 : vector<2x32xf32>
    %cst_34 = arith.constant 1.000000e+00 : f32
    %43 = vector.broadcast %cst_34 : f32 to vector<2x32xf32>
    %44 = arith.addf %43, %42 : vector<2x32xf32>
    %45 = arith.divf %43, %44 : vector<2x32xf32>
    %46 = arith.mulf %33, %4 : vector<2x32xf32>
    %47 = arith.mulf %25, %37 : vector<2x32xf32>
    %48 = arith.addf %46, %47 : vector<2x32xf32>
    %49 = math.tanh %48 : vector<2x32xf32>
    %50 = arith.mulf %45, %49 : vector<2x32xf32>
    %c0_35 = arith.constant 0 : index
    %c0_36 = arith.constant 0 : index
    %c0_37 = arith.constant 0 : index
    %51 = vector.load %arg3[%c0_35, %c0_36, %c0_37] : memref<8x2x32xf32, #tpu.memory_space<vmem>>, vector<1x2x32xf32>
    %52 = vector.shape_cast %51 : vector<1x2x32xf32> to vector<2x32xf32>
    %53 = vector.shape_cast %50 : vector<2x32xf32> to vector<1x2x32xf32>
    tpu.vector_store %arg3[%c0_35, %c0_36, %c0_37], %53 {strides = array<i32>} : memref<8x2x32xf32, #tpu.memory_space<vmem>>, vector<1x2x32xf32>,
    %54 = arith.truncf %50 : vector<2x32xf32> to vector<2x32xbf16>
    %c0_38 = arith.constant 0 : index
    %c0_39 = arith.constant 0 : index
    %c0_40 = arith.constant 0 : index
    %55 = vector.load %arg2[%c0_38, %c0_39, %c0_40] : memref<4x32x32xbf16, #tpu.memory_space<vmem>>, vector<1x32x32xbf16>
    %56 = vector.shape_cast %55 : vector<1x32x32xbf16> to vector<32x32xbf16>
    %cst_41 = arith.constant dense<0.000000e+00> : vector<2x32xf32>
    %57 = tpu.matmul %54, %56, %cst_41 {dimension_numbers = #tpu.dot_dimension_numbers<[1], [0], [0], [1], [0, 0, 1, 1], [], []>} : vector<2x32xbf16>, vector<32x32xbf16>, vector<2x32xf32> -> vector<2x32xf32>
    %c1_42 = arith.constant 1 : index
    %c0_43 = arith.constant 0 : index
    %c0_44 = arith.constant 0 : index
    %58 = vector.load %arg2[%c1_42, %c0_43, %c0_44] : memref<4x32x32xbf16, #tpu.memory_space<vmem>>, vector<1x32x32xbf16>
    %59 = vector.shape_cast %58 : vector<1x32x32xbf16> to vector<32x32xbf16>
    %cst_45 = arith.constant dense<0.000000e+00> : vector<2x32xf32>
    %60 = tpu.matmul %54, %59, %cst_45 {dimension_numbers = #tpu.dot_dimension_numbers<[1], [0], [0], [1], [0, 0, 1, 1], [], []>} : vector<2x32xbf16>, vector<32x32xbf16>, vector<2x32xf32> -> vector<2x32xf32>
    %c2_46 = arith.constant 2 : index
    %c0_47 = arith.constant 0 : index
    %c0_48 = arith.constant 0 : index
    %61 = vector.load %arg2[%c2_46, %c0_47, %c0_48] : memref<4x32x32xbf16, #tpu.memory_space<vmem>>, vector<1x32x32xbf16>
    %62 = vector.shape_cast %61 : vector<1x32x32xbf16> to vector<32x32xbf16>
    %cst_49 = arith.constant dense<0.000000e+00> : vector<2x32xf32>
    %63 = tpu.matmul %54, %62, %cst_49 {dimension_numbers = #tpu.dot_dimension_numbers<[1], [0], [0], [1], [0, 0, 1, 1], [], []>} : vector<2x32xbf16>, vector<32x32xbf16>, vector<2x32xf32> -> vector<2x32xf32>
    %c3_50 = arith.constant 3 : index
    %c0_51 = arith.constant 0 : index
    %c0_52 = arith.constant 0 : index
    %64 = vector.load %arg2[%c3_50, %c0_51, %c0_52] : memref<4x32x32xbf16, #tpu.memory_space<vmem>>, vector<1x32x32xbf16>
    %65 = vector.shape_cast %64 : vector<1x32x32xbf16> to vector<32x32xbf16>
    %cst_53 = arith.constant dense<0.000000e+00> : vector<2x32xf32>
    %66 = tpu.matmul %54, %65, %cst_53 {dimension_numbers = #tpu.dot_dimension_numbers<[1], [0], [0], [1], [0, 0, 1, 1], [], []>} : vector<2x32xbf16>, vector<32x32xbf16>, vector<2x32xf32> -> vector<2x32xf32>
    %c1_54 = arith.constant 1 : index
    %c0_55 = arith.constant 0 : index
    %c0_56 = arith.constant 0 : index
    %c0_57 = arith.constant 0 : index
    %67 = vector.load %arg1[%c1_54, %c0_55, %c0_56, %c0_57] : memref<8x4x2x32xf32, #tpu.memory_space<vmem>>, vector<1x1x2x32xf32>
    %68 = vector.shape_cast %67 : vector<1x1x2x32xf32> to vector<2x32xf32>
    %69 = arith.addf %68, %57 : vector<2x32xf32>
    %70 = arith.negf %69 : vector<2x32xf32>
    %71 = math.exp %70 : vector<2x32xf32>
    %cst_58 = arith.constant 1.000000e+00 : f32
    %72 = vector.broadcast %cst_58 : f32 to vector<2x32xf32>
    %73 = arith.addf %72, %71 : vector<2x32xf32>
    %74 = arith.divf %72, %73 : vector<2x32xf32>
    %c1_59 = arith.constant 1 : index
    %c1_60 = arith.constant 1 : index
    %c0_61 = arith.constant 0 : index
    %c0_62 = arith.constant 0 : index
    %75 = vector.load %arg1[%c1_59, %c1_60, %c0_61, %c0_62] : memref<8x4x2x32xf32, #tpu.memory_space<vmem>>, vector<1x1x2x32xf32>
    %76 = vector.shape_cast %75 : vector<1x1x2x32xf32> to vector<2x32xf32>
    %77 = arith.addf %76, %60 : vector<2x32xf32>
    %78 = arith.negf %77 : vector<2x32xf32>
    %79 = math.exp %78 : vector<2x32xf32>
    %cst_63 = arith.constant 1.000000e+00 : f32
    %80 = vector.broadcast %cst_63 : f32 to vector<2x32xf32>
    %81 = arith.addf %80, %79 : vector<2x32xf32>
    %82 = arith.divf %80, %81 : vector<2x32xf32>
    %c1_64 = arith.constant 1 : index
    %c2_65 = arith.constant 2 : index
    %c0_66 = arith.constant 0 : index
    %c0_67 = arith.constant 0 : index
    %83 = vector.load %arg1[%c1_64, %c2_65, %c0_66, %c0_67] : memref<8x4x2x32xf32, #tpu.memory_space<vmem>>, vector<1x1x2x32xf32>
    %84 = vector.shape_cast %83 : vector<1x1x2x32xf32> to vector<2x32xf32>
    %85 = arith.addf %84, %63 : vector<2x32xf32>
    %86 = math.tanh %85 : vector<2x32xf32>
    %c1_68 = arith.constant 1 : index
    %c3_69 = arith.constant 3 : index
    %c0_70 = arith.constant 0 : index
    %c0_71 = arith.constant 0 : index
    %87 = vector.load %arg1[%c1_68, %c3_69, %c0_70, %c0_71] : memref<8x4x2x32xf32, #tpu.memory_space<vmem>>, vector<1x1x2x32xf32>
    %88 = vector.shape_cast %87 : vector<1x1x2x32xf32> to vector<2x32xf32>
    %89 = arith.addf %88, %66 : vector<2x32xf32>
    %90 = arith.negf %89 : vector<2x32xf32>
    %91 = math.exp %90 : vector<2x32xf32>
    %cst_72 = arith.constant 1.000000e+00 : f32
    %92 = vector.broadcast %cst_72 : f32 to vector<2x32xf32>
    %93 = arith.addf %92, %91 : vector<2x32xf32>
    %94 = arith.divf %92, %93 : vector<2x32xf32>
    %95 = arith.mulf %82, %48 : vector<2x32xf32>
    %96 = arith.mulf %74, %86 : vector<2x32xf32>
    %97 = arith.addf %95, %96 : vector<2x32xf32>
    %98 = math.tanh %97 : vector<2x32xf32>
    %99 = arith.mulf %94, %98 : vector<2x32xf32>
    %c1_73 = arith.constant 1 : index
    %c0_74 = arith.constant 0 : index
    %c0_75 = arith.constant 0 : index
    %100 = vector.load %arg3[%c1_73, %c0_74, %c0_75] : memref<8x2x32xf32, #tpu.memory_space<vmem>>, vector<1x2x32xf32>
    %101 = vector.shape_cast %100 : vector<1x2x32xf32> to vector<2x32xf32>
    %102 = vector.shape_cast %99 : vector<2x32xf32> to vector<1x2x32xf32>
    tpu.vector_store %arg3[%c1_73, %c0_74, %c0_75], %102 {strides = array<i32>} : memref<8x2x32xf32, #tpu.memory_space<vmem>>, vector<1x2x32xf32>,
    %103 = arith.truncf %99 : vector<2x32xf32> to vector<2x32xbf16>
    %c0_76 = arith.constant 0 : index
    %c0_77 = arith.constant 0 : index
    %c0_78 = arith.constant 0 : index
    %104 = vector.load %arg2[%c0_76, %c0_77, %c0_78] : memref<4x32x32xbf16, #tpu.memory_space<vmem>>, vector<1x32x32xbf16>
    %105 = vector.shape_cast %104 : vector<1x32x32xbf16> to vector<32x32xbf16>
    %cst_79 = arith.constant dense<0.000000e+00> : vector<2x32xf32>
    %106 = tpu.matmul %103, %105, %cst_79 {dimension_numbers = #tpu.dot_dimension_numbers<[1], [0], [0], [1], [0, 0, 1, 1], [], []>} : vector<2x32xbf16>, vector<32x32xbf16>, vector<2x32xf32> -> vector<2x32xf32>
    %c1_80 = arith.constant 1 : index
    %c0_81 = arith.constant 0 : index
    %c0_82 = arith.constant 0 : index
    %107 = vector.load %arg2[%c1_80, %c0_81, %c0_82] : memref<4x32x32xbf16, #tpu.memory_space<vmem>>, vector<1x32x32xbf16>
    %108 = vector.shape_cast %107 : vector<1x32x32xbf16> to vector<32x32xbf16>
    %cst_83 = arith.constant dense<0.000000e+00> : vector<2x32xf32>
    %109 = tpu.matmul %103, %108, %cst_83 {dimension_numbers = #tpu.dot_dimension_numbers<[1], [0], [0], [1], [0, 0, 1, 1], [], []>} : vector<2x32xbf16>, vector<32x32xbf16>, vector<2x32xf32> -> vector<2x32xf32>
    %c2_84 = arith.constant 2 : index
    %c0_85 = arith.constant 0 : index
    %c0_86 = arith.constant 0 : index
    %110 = vector.load %arg2[%c2_84, %c0_85, %c0_86] : memref<4x32x32xbf16, #tpu.memory_space<vmem>>, vector<1x32x32xbf16>
    %111 = vector.shape_cast %110 : vector<1x32x32xbf16> to vector<32x32xbf16>
    %cst_87 = arith.constant dense<0.000000e+00> : vector<2x32xf32>
    %112 = tpu.matmul %103, %111, %cst_87 {dimension_numbers = #tpu.dot_dimension_numbers<[1], [0], [0], [1], [0, 0, 1, 1], [], []>} : vector<2x32xbf16>, vector<32x32xbf16>, vector<2x32xf32> -> vector<2x32xf32>
    %c3_88 = arith.constant 3 : index
    %c0_89 = arith.constant 0 : index
    %c0_90 = arith.constant 0 : index
    %113 = vector.load %arg2[%c3_88, %c0_89, %c0_90] : memref<4x32x32xbf16, #tpu.memory_space<vmem>>, vector<1x32x32xbf16>
    %114 = vector.shape_cast %113 : vector<1x32x32xbf16> to vector<32x32xbf16>
    %cst_91 = arith.constant dense<0.000000e+00> : vector<2x32xf32>
    %115 = tpu.matmul %103, %114, %cst_91 {dimension_numbers = #tpu.dot_dimension_numbers<[1], [0], [0], [1], [0, 0, 1, 1], [], []>} : vector<2x32xbf16>, vector<32x32xbf16>, vector<2x32xf32> -> vector<2x32xf32>
    %c2_92 = arith.constant 2 : index
    %c0_93 = arith.constant 0 : index
    %c0_94 = arith.constant 0 : index
    %c0_95 = arith.constant 0 : index
    %116 = vector.load %arg1[%c2_92, %c0_93, %c0_94, %c0_95] : memref<8x4x2x32xf32, #tpu.memory_space<vmem>>, vector<1x1x2x32xf32>
    %117 = vector.shape_cast %116 : vector<1x1x2x32xf32> to vector<2x32xf32>
    %118 = arith.addf %117, %106 : vector<2x32xf32>
    %119 = arith.negf %118 : vector<2x32xf32>
    %120 = math.exp %119 : vector<2x32xf32>
    %cst_96 = arith.constant 1.000000e+00 : f32
    %121 = vector.broadcast %cst_96 : f32 to vector<2x32xf32>
    %122 = arith.addf %121, %120 : vector<2x32xf32>
    %123 = arith.divf %121, %122 : vector<2x32xf32>
    %c2_97 = arith.constant 2 : index
    %c1_98 = arith.constant 1 : index
    %c0_99 = arith.constant 0 : index
    %c0_100 = arith.constant 0 : index
    %124 = vector.load %arg1[%c2_97, %c1_98, %c0_99, %c0_100] : memref<8x4x2x32xf32, #tpu.memory_space<vmem>>, vector<1x1x2x32xf32>
    %125 = vector.shape_cast %124 : vector<1x1x2x32xf32> to vector<2x32xf32>
    %126 = arith.addf %125, %109 : vector<2x32xf32>
    %127 = arith.negf %126 : vector<2x32xf32>
    %128 = math.exp %127 : vector<2x32xf32>
    %cst_101 = arith.constant 1.000000e+00 : f32
    %129 = vector.broadcast %cst_101 : f32 to vector<2x32xf32>
    %130 = arith.addf %129, %128 : vector<2x32xf32>
    %131 = arith.divf %129, %130 : vector<2x32xf32>
    %c2_102 = arith.constant 2 : index
    %c2_103 = arith.constant 2 : index
    %c0_104 = arith.constant 0 : index
    %c0_105 = arith.constant 0 : index
    %132 = vector.load %arg1[%c2_102, %c2_103, %c0_104, %c0_105] : memref<8x4x2x32xf32, #tpu.memory_space<vmem>>, vector<1x1x2x32xf32>
    %133 = vector.shape_cast %132 : vector<1x1x2x32xf32> to vector<2x32xf32>
    %134 = arith.addf %133, %112 : vector<2x32xf32>
    %135 = math.tanh %134 : vector<2x32xf32>
    %c2_106 = arith.constant 2 : index
    %c3_107 = arith.constant 3 : index
    %c0_108 = arith.constant 0 : index
    %c0_109 = arith.constant 0 : index
    %136 = vector.load %arg1[%c2_106, %c3_107, %c0_108, %c0_109] : memref<8x4x2x32xf32, #tpu.memory_space<vmem>>, vector<1x1x2x32xf32>
    %137 = vector.shape_cast %136 : vector<1x1x2x32xf32> to vector<2x32xf32>
    %138 = arith.addf %137, %115 : vector<2x32xf32>
    %139 = arith.negf %138 : vector<2x32xf32>
    %140 = math.exp %139 : vector<2x32xf32>
    %cst_110 = arith.constant 1.000000e+00 : f32
    %141 = vector.broadcast %cst_110 : f32 to vector<2x32xf32>
    %142 = arith.addf %141, %140 : vector<2x32xf32>
    %143 = arith.divf %141, %142 : vector<2x32xf32>
    %144 = arith.mulf %131, %97 : vector<2x32xf32>
    %145 = arith.mulf %123, %135 : vector<2x32xf32>
    %146 = arith.addf %144, %145 : vector<2x32xf32>
    %147 = math.tanh %146 : vector<2x32xf32>
    %148 = arith.mulf %143, %147 : vector<2x32xf32>
    %c2_111 = arith.constant 2 : index
    %c0_112 = arith.constant 0 : index
    %c0_113 = arith.constant 0 : index
    %149 = vector.load %arg3[%c2_111, %c0_112, %c0_113] : memref<8x2x32xf32, #tpu.memory_space<vmem>>, vector<1x2x32xf32>
    %150 = vector.shape_cast %149 : vector<1x2x32xf32> to vector<2x32xf32>
    %151 = vector.shape_cast %148 : vector<2x32xf32> to vector<1x2x32xf32>
    tpu.vector_store %arg3[%c2_111, %c0_112, %c0_113], %151 {strides = array<i32>} : memref<8x2x32xf32, #tpu.memory_space<vmem>>, vector<1x2x32xf32>,
    %152 = arith.truncf %148 : vector<2x32xf32> to vector<2x32xbf16>
    %c0_114 = arith.constant 0 : index
    %c0_115 = arith.constant 0 : index
    %c0_116 = arith.constant 0 : index
    %153 = vector.load %arg2[%c0_114, %c0_115, %c0_116] : memref<4x32x32xbf16, #tpu.memory_space<vmem>>, vector<1x32x32xbf16>
    %154 = vector.shape_cast %153 : vector<1x32x32xbf16> to vector<32x32xbf16>
    %cst_117 = arith.constant dense<0.000000e+00> : vector<2x32xf32>
    %155 = tpu.matmul %152, %154, %cst_117 {dimension_numbers = #tpu.dot_dimension_numbers<[1], [0], [0], [1], [0, 0, 1, 1], [], []>} : vector<2x32xbf16>, vector<32x32xbf16>, vector<2x32xf32> -> vector<2x32xf32>
    %c1_118 = arith.constant 1 : index
    %c0_119 = arith.constant 0 : index
    %c0_120 = arith.constant 0 : index
    %156 = vector.load %arg2[%c1_118, %c0_119, %c0_120] : memref<4x32x32xbf16, #tpu.memory_space<vmem>>, vector<1x32x32xbf16>
    %157 = vector.shape_cast %156 : vector<1x32x32xbf16> to vector<32x32xbf16>
    %cst_121 = arith.constant dense<0.000000e+00> : vector<2x32xf32>
    %158 = tpu.matmul %152, %157, %cst_121 {dimension_numbers = #tpu.dot_dimension_numbers<[1], [0], [0], [1], [0, 0, 1, 1], [], []>} : vector<2x32xbf16>, vector<32x32xbf16>, vector<2x32xf32> -> vector<2x32xf32>
    %c2_122 = arith.constant 2 : index
    %c0_123 = arith.constant 0 : index
    %c0_124 = arith.constant 0 : index
    %159 = vector.load %arg2[%c2_122, %c0_123, %c0_124] : memref<4x32x32xbf16, #tpu.memory_space<vmem>>, vector<1x32x32xbf16>
    %160 = vector.shape_cast %159 : vector<1x32x32xbf16> to vector<32x32xbf16>
    %cst_125 = arith.constant dense<0.000000e+00> : vector<2x32xf32>
    %161 = tpu.matmul %152, %160, %cst_125 {dimension_numbers = #tpu.dot_dimension_numbers<[1], [0], [0], [1], [0, 0, 1, 1], [], []>} : vector<2x32xbf16>, vector<32x32xbf16>, vector<2x32xf32> -> vector<2x32xf32>
    %c3_126 = arith.constant 3 : index
    %c0_127 = arith.constant 0 : index
    %c0_128 = arith.constant 0 : index
    %162 = vector.load %arg2[%c3_126, %c0_127, %c0_128] : memref<4x32x32xbf16, #tpu.memory_space<vmem>>, vector<1x32x32xbf16>
    %163 = vector.shape_cast %162 : vector<1x32x32xbf16> to vector<32x32xbf16>
    %cst_129 = arith.constant dense<0.000000e+00> : vector<2x32xf32>
    %164 = tpu.matmul %152, %163, %cst_129 {dimension_numbers = #tpu.dot_dimension_numbers<[1], [0], [0], [1], [0, 0, 1, 1], [], []>} : vector<2x32xbf16>, vector<32x32xbf16>, vector<2x32xf32> -> vector<2x32xf32>
    %c3_130 = arith.constant 3 : index
    %c0_131 = arith.constant 0 : index
    %c0_132 = arith.constant 0 : index
    %c0_133 = arith.constant 0 : index
    %165 = vector.load %arg1[%c3_130, %c0_131, %c0_132, %c0_133] : memref<8x4x2x32xf32, #tpu.memory_space<vmem>>, vector<1x1x2x32xf32>
    %166 = vector.shape_cast %165 : vector<1x1x2x32xf32> to vector<2x32xf32>
    %167 = arith.addf %166, %155 : vector<2x32xf32>
    %168 = arith.negf %167 : vector<2x32xf32>
    %169 = math.exp %168 : vector<2x32xf32>
    %cst_134 = arith.constant 1.000000e+00 : f32
    %170 = vector.broadcast %cst_134 : f32 to vector<2x32xf32>
    %171 = arith.addf %170, %169 : vector<2x32xf32>
    %172 = arith.divf %170, %171 : vector<2x32xf32>
    %c3_135 = arith.constant 3 : index
    %c1_136 = arith.constant 1 : index
    %c0_137 = arith.constant 0 : index
    %c0_138 = arith.constant 0 : index
    %173 = vector.load %arg1[%c3_135, %c1_136, %c0_137, %c0_138] : memref<8x4x2x32xf32, #tpu.memory_space<vmem>>, vector<1x1x2x32xf32>
    %174 = vector.shape_cast %173 : vector<1x1x2x32xf32> to vector<2x32xf32>
    %175 = arith.addf %174, %158 : vector<2x32xf32>
    %176 = arith.negf %175 : vector<2x32xf32>
    %177 = math.exp %176 : vector<2x32xf32>
    %cst_139 = arith.constant 1.000000e+00 : f32
    %178 = vector.broadcast %cst_139 : f32 to vector<2x32xf32>
    %179 = arith.addf %178, %177 : vector<2x32xf32>
    %180 = arith.divf %178, %179 : vector<2x32xf32>
    %c3_140 = arith.constant 3 : index
    %c2_141 = arith.constant 2 : index
    %c0_142 = arith.constant 0 : index
    %c0_143 = arith.constant 0 : index
    %181 = vector.load %arg1[%c3_140, %c2_141, %c0_142, %c0_143] : memref<8x4x2x32xf32, #tpu.memory_space<vmem>>, vector<1x1x2x32xf32>
    %182 = vector.shape_cast %181 : vector<1x1x2x32xf32> to vector<2x32xf32>
    %183 = arith.addf %182, %161 : vector<2x32xf32>
    %184 = math.tanh %183 : vector<2x32xf32>
    %c3_144 = arith.constant 3 : index
    %c3_145 = arith.constant 3 : index
    %c0_146 = arith.constant 0 : index
    %c0_147 = arith.constant 0 : index
    %185 = vector.load %arg1[%c3_144, %c3_145, %c0_146, %c0_147] : memref<8x4x2x32xf32, #tpu.memory_space<vmem>>, vector<1x1x2x32xf32>
    %186 = vector.shape_cast %185 : vector<1x1x2x32xf32> to vector<2x32xf32>
    %187 = arith.addf %186, %164 : vector<2x32xf32>
    %188 = arith.negf %187 : vector<2x32xf32>
    %189 = math.exp %188 : vector<2x32xf32>
    %cst_148 = arith.constant 1.000000e+00 : f32
    %190 = vector.broadcast %cst_148 : f32 to vector<2x32xf32>
    %191 = arith.addf %190, %189 : vector<2x32xf32>
    %192 = arith.divf %190, %191 : vector<2x32xf32>
    %193 = arith.mulf %180, %146 : vector<2x32xf32>
    %194 = arith.mulf %172, %184 : vector<2x32xf32>
    %195 = arith.addf %193, %194 : vector<2x32xf32>
    %196 = math.tanh %195 : vector<2x32xf32>
    %197 = arith.mulf %192, %196 : vector<2x32xf32>
    %c3_149 = arith.constant 3 : index
    %c0_150 = arith.constant 0 : index
    %c0_151 = arith.constant 0 : index
    %198 = vector.load %arg3[%c3_149, %c0_150, %c0_151] : memref<8x2x32xf32, #tpu.memory_space<vmem>>, vector<1x2x32xf32>
    %199 = vector.shape_cast %198 : vector<1x2x32xf32> to vector<2x32xf32>
    %200 = vector.shape_cast %197 : vector<2x32xf32> to vector<1x2x32xf32>
    tpu.vector_store %arg3[%c3_149, %c0_150, %c0_151], %200 {strides = array<i32>} : memref<8x2x32xf32, #tpu.memory_space<vmem>>, vector<1x2x32xf32>,
    %201 = arith.truncf %197 : vector<2x32xf32> to vector<2x32xbf16>
    %c0_152 = arith.constant 0 : index
    %c0_153 = arith.constant 0 : index
    %c0_154 = arith.constant 0 : index
    %202 = vector.load %arg2[%c0_152, %c0_153, %c0_154] : memref<4x32x32xbf16, #tpu.memory_space<vmem>>, vector<1x32x32xbf16>
    %203 = vector.shape_cast %202 : vector<1x32x32xbf16> to vector<32x32xbf16>
    %cst_155 = arith.constant dense<0.000000e+00> : vector<2x32xf32>
    %204 = tpu.matmul %201, %203, %cst_155 {dimension_numbers = #tpu.dot_dimension_numbers<[1], [0], [0], [1], [0, 0, 1, 1], [], []>} : vector<2x32xbf16>, vector<32x32xbf16>, vector<2x32xf32> -> vector<2x32xf32>
    %c1_156 = arith.constant 1 : index
    %c0_157 = arith.constant 0 : index
    %c0_158 = arith.constant 0 : index
    %205 = vector.load %arg2[%c1_156, %c0_157, %c0_158] : memref<4x32x32xbf16, #tpu.memory_space<vmem>>, vector<1x32x32xbf16>
    %206 = vector.shape_cast %205 : vector<1x32x32xbf16> to vector<32x32xbf16>
    %cst_159 = arith.constant dense<0.000000e+00> : vector<2x32xf32>
    %207 = tpu.matmul %201, %206, %cst_159 {dimension_numbers = #tpu.dot_dimension_numbers<[1], [0], [0], [1], [0, 0, 1, 1], [], []>} : vector<2x32xbf16>, vector<32x32xbf16>, vector<2x32xf32> -> vector<2x32xf32>
    %c2_160 = arith.constant 2 : index
    %c0_161 = arith.constant 0 : index
    %c0_162 = arith.constant 0 : index
    %208 = vector.load %arg2[%c2_160, %c0_161, %c0_162] : memref<4x32x32xbf16, #tpu.memory_space<vmem>>, vector<1x32x32xbf16>
    %209 = vector.shape_cast %208 : vector<1x32x32xbf16> to vector<32x32xbf16>
    %cst_163 = arith.constant dense<0.000000e+00> : vector<2x32xf32>
    %210 = tpu.matmul %201, %209, %cst_163 {dimension_numbers = #tpu.dot_dimension_numbers<[1], [0], [0], [1], [0, 0, 1, 1], [], []>} : vector<2x32xbf16>, vector<32x32xbf16>, vector<2x32xf32> -> vector<2x32xf32>
    %c3_164 = arith.constant 3 : index
    %c0_165 = arith.constant 0 : index
    %c0_166 = arith.constant 0 : index
    %211 = vector.load %arg2[%c3_164, %c0_165, %c0_166] : memref<4x32x32xbf16, #tpu.memory_space<vmem>>, vector<1x32x32xbf16>
    %212 = vector.shape_cast %211 : vector<1x32x32xbf16> to vector<32x32xbf16>
    %cst_167 = arith.constant dense<0.000000e+00> : vector<2x32xf32>
    %213 = tpu.matmul %201, %212, %cst_167 {dimension_numbers = #tpu.dot_dimension_numbers<[1], [0], [0], [1], [0, 0, 1, 1], [], []>} : vector<2x32xbf16>, vector<32x32xbf16>, vector<2x32xf32> -> vector<2x32xf32>
    %c4 = arith.constant 4 : index
    %c0_168 = arith.constant 0 : index
    %c0_169 = arith.constant 0 : index
    %c0_170 = arith.constant 0 : index
    %214 = vector.load %arg1[%c4, %c0_168, %c0_169, %c0_170] : memref<8x4x2x32xf32, #tpu.memory_space<vmem>>, vector<1x1x2x32xf32>
    %215 = vector.shape_cast %214 : vector<1x1x2x32xf32> to vector<2x32xf32>
    %216 = arith.addf %215, %204 : vector<2x32xf32>
    %217 = arith.negf %216 : vector<2x32xf32>
    %218 = math.exp %217 : vector<2x32xf32>
    %cst_171 = arith.constant 1.000000e+00 : f32
    %219 = vector.broadcast %cst_171 : f32 to vector<2x32xf32>
    %220 = arith.addf %219, %218 : vector<2x32xf32>
    %221 = arith.divf %219, %220 : vector<2x32xf32>
    %c4_172 = arith.constant 4 : index
    %c1_173 = arith.constant 1 : index
    %c0_174 = arith.constant 0 : index
    %c0_175 = arith.constant 0 : index
    %222 = vector.load %arg1[%c4_172, %c1_173, %c0_174, %c0_175] : memref<8x4x2x32xf32, #tpu.memory_space<vmem>>, vector<1x1x2x32xf32>
    %223 = vector.shape_cast %222 : vector<1x1x2x32xf32> to vector<2x32xf32>
    %224 = arith.addf %223, %207 : vector<2x32xf32>
    %225 = arith.negf %224 : vector<2x32xf32>
    %226 = math.exp %225 : vector<2x32xf32>
    %cst_176 = arith.constant 1.000000e+00 : f32
    %227 = vector.broadcast %cst_176 : f32 to vector<2x32xf32>
    %228 = arith.addf %227, %226 : vector<2x32xf32>
    %229 = arith.divf %227, %228 : vector<2x32xf32>
    %c4_177 = arith.constant 4 : index
    %c2_178 = arith.constant 2 : index
    %c0_179 = arith.constant 0 : index
    %c0_180 = arith.constant 0 : index
    %230 = vector.load %arg1[%c4_177, %c2_178, %c0_179, %c0_180] : memref<8x4x2x32xf32, #tpu.memory_space<vmem>>, vector<1x1x2x32xf32>
    %231 = vector.shape_cast %230 : vector<1x1x2x32xf32> to vector<2x32xf32>
    %232 = arith.addf %231, %210 : vector<2x32xf32>
    %233 = math.tanh %232 : vector<2x32xf32>
    %c4_181 = arith.constant 4 : index
    %c3_182 = arith.constant 3 : index
    %c0_183 = arith.constant 0 : index
    %c0_184 = arith.constant 0 : index
    %234 = vector.load %arg1[%c4_181, %c3_182, %c0_183, %c0_184] : memref<8x4x2x32xf32, #tpu.memory_space<vmem>>, vector<1x1x2x32xf32>
    %235 = vector.shape_cast %234 : vector<1x1x2x32xf32> to vector<2x32xf32>
    %236 = arith.addf %235, %213 : vector<2x32xf32>
    %237 = arith.negf %236 : vector<2x32xf32>
    %238 = math.exp %237 : vector<2x32xf32>
    %cst_185 = arith.constant 1.000000e+00 : f32
    %239 = vector.broadcast %cst_185 : f32 to vector<2x32xf32>
    %240 = arith.addf %239, %238 : vector<2x32xf32>
    %241 = arith.divf %239, %240 : vector<2x32xf32>
    %242 = arith.mulf %229, %195 : vector<2x32xf32>
    %243 = arith.mulf %221, %233 : vector<2x32xf32>
    %244 = arith.addf %242, %243 : vector<2x32xf32>
    %245 = math.tanh %244 : vector<2x32xf32>
    %246 = arith.mulf %241, %245 : vector<2x32xf32>
    %c4_186 = arith.constant 4 : index
    %c0_187 = arith.constant 0 : index
    %c0_188 = arith.constant 0 : index
    %247 = vector.load %arg3[%c4_186, %c0_187, %c0_188] : memref<8x2x32xf32, #tpu.memory_space<vmem>>, vector<1x2x32xf32>
    %248 = vector.shape_cast %247 : vector<1x2x32xf32> to vector<2x32xf32>
    %249 = vector.shape_cast %246 : vector<2x32xf32> to vector<1x2x32xf32>
    tpu.vector_store %arg3[%c4_186, %c0_187, %c0_188], %249 {strides = array<i32>} : memref<8x2x32xf32, #tpu.memory_space<vmem>>, vector<1x2x32xf32>,
    %250 = arith.truncf %246 : vector<2x32xf32> to vector<2x32xbf16>
    %c0_189 = arith.constant 0 : index
    %c0_190 = arith.constant 0 : index
    %c0_191 = arith.constant 0 : index
    %251 = vector.load %arg2[%c0_189, %c0_190, %c0_191] : memref<4x32x32xbf16, #tpu.memory_space<vmem>>, vector<1x32x32xbf16>
    %252 = vector.shape_cast %251 : vector<1x32x32xbf16> to vector<32x32xbf16>
    %cst_192 = arith.constant dense<0.000000e+00> : vector<2x32xf32>
    %253 = tpu.matmul %250, %252, %cst_192 {dimension_numbers = #tpu.dot_dimension_numbers<[1], [0], [0], [1], [0, 0, 1, 1], [], []>} : vector<2x32xbf16>, vector<32x32xbf16>, vector<2x32xf32> -> vector<2x32xf32>
    %c1_193 = arith.constant 1 : index
    %c0_194 = arith.constant 0 : index
    %c0_195 = arith.constant 0 : index
    %254 = vector.load %arg2[%c1_193, %c0_194, %c0_195] : memref<4x32x32xbf16, #tpu.memory_space<vmem>>, vector<1x32x32xbf16>
    %255 = vector.shape_cast %254 : vector<1x32x32xbf16> to vector<32x32xbf16>
    %cst_196 = arith.constant dense<0.000000e+00> : vector<2x32xf32>
    %256 = tpu.matmul %250, %255, %cst_196 {dimension_numbers = #tpu.dot_dimension_numbers<[1], [0], [0], [1], [0, 0, 1, 1], [], []>} : vector<2x32xbf16>, vector<32x32xbf16>, vector<2x32xf32> -> vector<2x32xf32>
    %c2_197 = arith.constant 2 : index
    %c0_198 = arith.constant 0 : index
    %c0_199 = arith.constant 0 : index
    %257 = vector.load %arg2[%c2_197, %c0_198, %c0_199] : memref<4x32x32xbf16, #tpu.memory_space<vmem>>, vector<1x32x32xbf16>
    %258 = vector.shape_cast %257 : vector<1x32x32xbf16> to vector<32x32xbf16>
    %cst_200 = arith.constant dense<0.000000e+00> : vector<2x32xf32>
    %259 = tpu.matmul %250, %258, %cst_200 {dimension_numbers = #tpu.dot_dimension_numbers<[1], [0], [0], [1], [0, 0, 1, 1], [], []>} : vector<2x32xbf16>, vector<32x32xbf16>, vector<2x32xf32> -> vector<2x32xf32>
    %c3_201 = arith.constant 3 : index
    %c0_202 = arith.constant 0 : index
    %c0_203 = arith.constant 0 : index
    %260 = vector.load %arg2[%c3_201, %c0_202, %c0_203] : memref<4x32x32xbf16, #tpu.memory_space<vmem>>, vector<1x32x32xbf16>
    %261 = vector.shape_cast %260 : vector<1x32x32xbf16> to vector<32x32xbf16>
    %cst_204 = arith.constant dense<0.000000e+00> : vector<2x32xf32>
    %262 = tpu.matmul %250, %261, %cst_204 {dimension_numbers = #tpu.dot_dimension_numbers<[1], [0], [0], [1], [0, 0, 1, 1], [], []>} : vector<2x32xbf16>, vector<32x32xbf16>, vector<2x32xf32> -> vector<2x32xf32>
    %c5 = arith.constant 5 : index
    %c0_205 = arith.constant 0 : index
    %c0_206 = arith.constant 0 : index
    %c0_207 = arith.constant 0 : index
    %263 = vector.load %arg1[%c5, %c0_205, %c0_206, %c0_207] : memref<8x4x2x32xf32, #tpu.memory_space<vmem>>, vector<1x1x2x32xf32>
    %264 = vector.shape_cast %263 : vector<1x1x2x32xf32> to vector<2x32xf32>
    %265 = arith.addf %264, %253 : vector<2x32xf32>
    %266 = arith.negf %265 : vector<2x32xf32>
    %267 = math.exp %266 : vector<2x32xf32>
    %cst_208 = arith.constant 1.000000e+00 : f32
    %268 = vector.broadcast %cst_208 : f32 to vector<2x32xf32>
    %269 = arith.addf %268, %267 : vector<2x32xf32>
    %270 = arith.divf %268, %269 : vector<2x32xf32>
    %c5_209 = arith.constant 5 : index
    %c1_210 = arith.constant 1 : index
    %c0_211 = arith.constant 0 : index
    %c0_212 = arith.constant 0 : index
    %271 = vector.load %arg1[%c5_209, %c1_210, %c0_211, %c0_212] : memref<8x4x2x32xf32, #tpu.memory_space<vmem>>, vector<1x1x2x32xf32>
    %272 = vector.shape_cast %271 : vector<1x1x2x32xf32> to vector<2x32xf32>
    %273 = arith.addf %272, %256 : vector<2x32xf32>
    %274 = arith.negf %273 : vector<2x32xf32>
    %275 = math.exp %274 : vector<2x32xf32>
    %cst_213 = arith.constant 1.000000e+00 : f32
    %276 = vector.broadcast %cst_213 : f32 to vector<2x32xf32>
    %277 = arith.addf %276, %275 : vector<2x32xf32>
    %278 = arith.divf %276, %277 : vector<2x32xf32>
    %c5_214 = arith.constant 5 : index
    %c2_215 = arith.constant 2 : index
    %c0_216 = arith.constant 0 : index
    %c0_217 = arith.constant 0 : index
    %279 = vector.load %arg1[%c5_214, %c2_215, %c0_216, %c0_217] : memref<8x4x2x32xf32, #tpu.memory_space<vmem>>, vector<1x1x2x32xf32>
    %280 = vector.shape_cast %279 : vector<1x1x2x32xf32> to vector<2x32xf32>
    %281 = arith.addf %280, %259 : vector<2x32xf32>
    %282 = math.tanh %281 : vector<2x32xf32>
    %c5_218 = arith.constant 5 : index
    %c3_219 = arith.constant 3 : index
    %c0_220 = arith.constant 0 : index
    %c0_221 = arith.constant 0 : index
    %283 = vector.load %arg1[%c5_218, %c3_219, %c0_220, %c0_221] : memref<8x4x2x32xf32, #tpu.memory_space<vmem>>, vector<1x1x2x32xf32>
    %284 = vector.shape_cast %283 : vector<1x1x2x32xf32> to vector<2x32xf32>
    %285 = arith.addf %284, %262 : vector<2x32xf32>
    %286 = arith.negf %285 : vector<2x32xf32>
    %287 = math.exp %286 : vector<2x32xf32>
    %cst_222 = arith.constant 1.000000e+00 : f32
    %288 = vector.broadcast %cst_222 : f32 to vector<2x32xf32>
    %289 = arith.addf %288, %287 : vector<2x32xf32>
    %290 = arith.divf %288, %289 : vector<2x32xf32>
    %291 = arith.mulf %278, %244 : vector<2x32xf32>
    %292 = arith.mulf %270, %282 : vector<2x32xf32>
    %293 = arith.addf %291, %292 : vector<2x32xf32>
    %294 = math.tanh %293 : vector<2x32xf32>
    %295 = arith.mulf %290, %294 : vector<2x32xf32>
    %c5_223 = arith.constant 5 : index
    %c0_224 = arith.constant 0 : index
    %c0_225 = arith.constant 0 : index
    %296 = vector.load %arg3[%c5_223, %c0_224, %c0_225] : memref<8x2x32xf32, #tpu.memory_space<vmem>>, vector<1x2x32xf32>
    %297 = vector.shape_cast %296 : vector<1x2x32xf32> to vector<2x32xf32>
    %298 = vector.shape_cast %295 : vector<2x32xf32> to vector<1x2x32xf32>
    tpu.vector_store %arg3[%c5_223, %c0_224, %c0_225], %298 {strides = array<i32>} : memref<8x2x32xf32, #tpu.memory_space<vmem>>, vector<1x2x32xf32>,
    %299 = arith.truncf %295 : vector<2x32xf32> to vector<2x32xbf16>
    %c0_226 = arith.constant 0 : index
    %c0_227 = arith.constant 0 : index
    %c0_228 = arith.constant 0 : index
    %300 = vector.load %arg2[%c0_226, %c0_227, %c0_228] : memref<4x32x32xbf16, #tpu.memory_space<vmem>>, vector<1x32x32xbf16>
    %301 = vector.shape_cast %300 : vector<1x32x32xbf16> to vector<32x32xbf16>
    %cst_229 = arith.constant dense<0.000000e+00> : vector<2x32xf32>
    %302 = tpu.matmul %299, %301, %cst_229 {dimension_numbers = #tpu.dot_dimension_numbers<[1], [0], [0], [1], [0, 0, 1, 1], [], []>} : vector<2x32xbf16>, vector<32x32xbf16>, vector<2x32xf32> -> vector<2x32xf32>
    %c1_230 = arith.constant 1 : index
    %c0_231 = arith.constant 0 : index
    %c0_232 = arith.constant 0 : index
    %303 = vector.load %arg2[%c1_230, %c0_231, %c0_232] : memref<4x32x32xbf16, #tpu.memory_space<vmem>>, vector<1x32x32xbf16>
    %304 = vector.shape_cast %303 : vector<1x32x32xbf16> to vector<32x32xbf16>
    %cst_233 = arith.constant dense<0.000000e+00> : vector<2x32xf32>
    %305 = tpu.matmul %299, %304, %cst_233 {dimension_numbers = #tpu.dot_dimension_numbers<[1], [0], [0], [1], [0, 0, 1, 1], [], []>} : vector<2x32xbf16>, vector<32x32xbf16>, vector<2x32xf32> -> vector<2x32xf32>
    %c2_234 = arith.constant 2 : index
    %c0_235 = arith.constant 0 : index
    %c0_236 = arith.constant 0 : index
    %306 = vector.load %arg2[%c2_234, %c0_235, %c0_236] : memref<4x32x32xbf16, #tpu.memory_space<vmem>>, vector<1x32x32xbf16>
    %307 = vector.shape_cast %306 : vector<1x32x32xbf16> to vector<32x32xbf16>
    %cst_237 = arith.constant dense<0.000000e+00> : vector<2x32xf32>
    %308 = tpu.matmul %299, %307, %cst_237 {dimension_numbers = #tpu.dot_dimension_numbers<[1], [0], [0], [1], [0, 0, 1, 1], [], []>} : vector<2x32xbf16>, vector<32x32xbf16>, vector<2x32xf32> -> vector<2x32xf32>
    %c3_238 = arith.constant 3 : index
    %c0_239 = arith.constant 0 : index
    %c0_240 = arith.constant 0 : index
    %309 = vector.load %arg2[%c3_238, %c0_239, %c0_240] : memref<4x32x32xbf16, #tpu.memory_space<vmem>>, vector<1x32x32xbf16>
    %310 = vector.shape_cast %309 : vector<1x32x32xbf16> to vector<32x32xbf16>
    %cst_241 = arith.constant dense<0.000000e+00> : vector<2x32xf32>
    %311 = tpu.matmul %299, %310, %cst_241 {dimension_numbers = #tpu.dot_dimension_numbers<[1], [0], [0], [1], [0, 0, 1, 1], [], []>} : vector<2x32xbf16>, vector<32x32xbf16>, vector<2x32xf32> -> vector<2x32xf32>
    %c6 = arith.constant 6 : index
    %c0_242 = arith.constant 0 : index
    %c0_243 = arith.constant 0 : index
    %c0_244 = arith.constant 0 : index
    %312 = vector.load %arg1[%c6, %c0_242, %c0_243, %c0_244] : memref<8x4x2x32xf32, #tpu.memory_space<vmem>>, vector<1x1x2x32xf32>
    %313 = vector.shape_cast %312 : vector<1x1x2x32xf32> to vector<2x32xf32>
    %314 = arith.addf %313, %302 : vector<2x32xf32>
    %315 = arith.negf %314 : vector<2x32xf32>
    %316 = math.exp %315 : vector<2x32xf32>
    %cst_245 = arith.constant 1.000000e+00 : f32
    %317 = vector.broadcast %cst_245 : f32 to vector<2x32xf32>
    %318 = arith.addf %317, %316 : vector<2x32xf32>
    %319 = arith.divf %317, %318 : vector<2x32xf32>
    %c6_246 = arith.constant 6 : index
    %c1_247 = arith.constant 1 : index
    %c0_248 = arith.constant 0 : index
    %c0_249 = arith.constant 0 : index
    %320 = vector.load %arg1[%c6_246, %c1_247, %c0_248, %c0_249] : memref<8x4x2x32xf32, #tpu.memory_space<vmem>>, vector<1x1x2x32xf32>
    %321 = vector.shape_cast %320 : vector<1x1x2x32xf32> to vector<2x32xf32>
    %322 = arith.addf %321, %305 : vector<2x32xf32>
    %323 = arith.negf %322 : vector<2x32xf32>
    %324 = math.exp %323 : vector<2x32xf32>
    %cst_250 = arith.constant 1.000000e+00 : f32
    %325 = vector.broadcast %cst_250 : f32 to vector<2x32xf32>
    %326 = arith.addf %325, %324 : vector<2x32xf32>
    %327 = arith.divf %325, %326 : vector<2x32xf32>
    %c6_251 = arith.constant 6 : index
    %c2_252 = arith.constant 2 : index
    %c0_253 = arith.constant 0 : index
    %c0_254 = arith.constant 0 : index
    %328 = vector.load %arg1[%c6_251, %c2_252, %c0_253, %c0_254] : memref<8x4x2x32xf32, #tpu.memory_space<vmem>>, vector<1x1x2x32xf32>
    %329 = vector.shape_cast %328 : vector<1x1x2x32xf32> to vector<2x32xf32>
    %330 = arith.addf %329, %308 : vector<2x32xf32>
    %331 = math.tanh %330 : vector<2x32xf32>
    %c6_255 = arith.constant 6 : index
    %c3_256 = arith.constant 3 : index
    %c0_257 = arith.constant 0 : index
    %c0_258 = arith.constant 0 : index
    %332 = vector.load %arg1[%c6_255, %c3_256, %c0_257, %c0_258] : memref<8x4x2x32xf32, #tpu.memory_space<vmem>>, vector<1x1x2x32xf32>
    %333 = vector.shape_cast %332 : vector<1x1x2x32xf32> to vector<2x32xf32>
    %334 = arith.addf %333, %311 : vector<2x32xf32>
    %335 = arith.negf %334 : vector<2x32xf32>
    %336 = math.exp %335 : vector<2x32xf32>
    %cst_259 = arith.constant 1.000000e+00 : f32
    %337 = vector.broadcast %cst_259 : f32 to vector<2x32xf32>
    %338 = arith.addf %337, %336 : vector<2x32xf32>
    %339 = arith.divf %337, %338 : vector<2x32xf32>
    %340 = arith.mulf %327, %293 : vector<2x32xf32>
    %341 = arith.mulf %319, %331 : vector<2x32xf32>
    %342 = arith.addf %340, %341 : vector<2x32xf32>
    %343 = math.tanh %342 : vector<2x32xf32>
    %344 = arith.mulf %339, %343 : vector<2x32xf32>
    %c6_260 = arith.constant 6 : index
    %c0_261 = arith.constant 0 : index
    %c0_262 = arith.constant 0 : index
    %345 = vector.load %arg3[%c6_260, %c0_261, %c0_262] : memref<8x2x32xf32, #tpu.memory_space<vmem>>, vector<1x2x32xf32>
    %346 = vector.shape_cast %345 : vector<1x2x32xf32> to vector<2x32xf32>
    %347 = vector.shape_cast %344 : vector<2x32xf32> to vector<1x2x32xf32>
    tpu.vector_store %arg3[%c6_260, %c0_261, %c0_262], %347 {strides = array<i32>} : memref<8x2x32xf32, #tpu.memory_space<vmem>>, vector<1x2x32xf32>,
    %348 = arith.truncf %344 : vector<2x32xf32> to vector<2x32xbf16>
    %c0_263 = arith.constant 0 : index
    %c0_264 = arith.constant 0 : index
    %c0_265 = arith.constant 0 : index
    %349 = vector.load %arg2[%c0_263, %c0_264, %c0_265] : memref<4x32x32xbf16, #tpu.memory_space<vmem>>, vector<1x32x32xbf16>
    %350 = vector.shape_cast %349 : vector<1x32x32xbf16> to vector<32x32xbf16>
    %cst_266 = arith.constant dense<0.000000e+00> : vector<2x32xf32>
    %351 = tpu.matmul %348, %350, %cst_266 {dimension_numbers = #tpu.dot_dimension_numbers<[1], [0], [0], [1], [0, 0, 1, 1], [], []>} : vector<2x32xbf16>, vector<32x32xbf16>, vector<2x32xf32> -> vector<2x32xf32>
    %c1_267 = arith.constant 1 : index
    %c0_268 = arith.constant 0 : index
    %c0_269 = arith.constant 0 : index
    %352 = vector.load %arg2[%c1_267, %c0_268, %c0_269] : memref<4x32x32xbf16, #tpu.memory_space<vmem>>, vector<1x32x32xbf16>
    %353 = vector.shape_cast %352 : vector<1x32x32xbf16> to vector<32x32xbf16>
    %cst_270 = arith.constant dense<0.000000e+00> : vector<2x32xf32>
    %354 = tpu.matmul %348, %353, %cst_270 {dimension_numbers = #tpu.dot_dimension_numbers<[1], [0], [0], [1], [0, 0, 1, 1], [], []>} : vector<2x32xbf16>, vector<32x32xbf16>, vector<2x32xf32> -> vector<2x32xf32>
    %c2_271 = arith.constant 2 : index
    %c0_272 = arith.constant 0 : index
    %c0_273 = arith.constant 0 : index
    %355 = vector.load %arg2[%c2_271, %c0_272, %c0_273] : memref<4x32x32xbf16, #tpu.memory_space<vmem>>, vector<1x32x32xbf16>
    %356 = vector.shape_cast %355 : vector<1x32x32xbf16> to vector<32x32xbf16>
    %cst_274 = arith.constant dense<0.000000e+00> : vector<2x32xf32>
    %357 = tpu.matmul %348, %356, %cst_274 {dimension_numbers = #tpu.dot_dimension_numbers<[1], [0], [0], [1], [0, 0, 1, 1], [], []>} : vector<2x32xbf16>, vector<32x32xbf16>, vector<2x32xf32> -> vector<2x32xf32>
    %c3_275 = arith.constant 3 : index
    %c0_276 = arith.constant 0 : index
    %c0_277 = arith.constant 0 : index
    %358 = vector.load %arg2[%c3_275, %c0_276, %c0_277] : memref<4x32x32xbf16, #tpu.memory_space<vmem>>, vector<1x32x32xbf16>
    %359 = vector.shape_cast %358 : vector<1x32x32xbf16> to vector<32x32xbf16>
    %cst_278 = arith.constant dense<0.000000e+00> : vector<2x32xf32>
    %360 = tpu.matmul %348, %359, %cst_278 {dimension_numbers = #tpu.dot_dimension_numbers<[1], [0], [0], [1], [0, 0, 1, 1], [], []>} : vector<2x32xbf16>, vector<32x32xbf16>, vector<2x32xf32> -> vector<2x32xf32>
    %c7 = arith.constant 7 : index
    %c0_279 = arith.constant 0 : index
    %c0_280 = arith.constant 0 : index
    %c0_281 = arith.constant 0 : index
    %361 = vector.load %arg1[%c7, %c0_279, %c0_280, %c0_281] : memref<8x4x2x32xf32, #tpu.memory_space<vmem>>, vector<1x1x2x32xf32>
    %362 = vector.shape_cast %361 : vector<1x1x2x32xf32> to vector<2x32xf32>
    %363 = arith.addf %362, %351 : vector<2x32xf32>
    %364 = arith.negf %363 : vector<2x32xf32>
    %365 = math.exp %364 : vector<2x32xf32>
    %cst_282 = arith.constant 1.000000e+00 : f32
    %366 = vector.broadcast %cst_282 : f32 to vector<2x32xf32>
    %367 = arith.addf %366, %365 : vector<2x32xf32>
    %368 = arith.divf %366, %367 : vector<2x32xf32>
    %c7_283 = arith.constant 7 : index
    %c1_284 = arith.constant 1 : index
    %c0_285 = arith.constant 0 : index
    %c0_286 = arith.constant 0 : index
    %369 = vector.load %arg1[%c7_283, %c1_284, %c0_285, %c0_286] : memref<8x4x2x32xf32, #tpu.memory_space<vmem>>, vector<1x1x2x32xf32>
    %370 = vector.shape_cast %369 : vector<1x1x2x32xf32> to vector<2x32xf32>
    %371 = arith.addf %370, %354 : vector<2x32xf32>
    %372 = arith.negf %371 : vector<2x32xf32>
    %373 = math.exp %372 : vector<2x32xf32>
    %cst_287 = arith.constant 1.000000e+00 : f32
    %374 = vector.broadcast %cst_287 : f32 to vector<2x32xf32>
    %375 = arith.addf %374, %373 : vector<2x32xf32>
    %376 = arith.divf %374, %375 : vector<2x32xf32>
    %c7_288 = arith.constant 7 : index
    %c2_289 = arith.constant 2 : index
    %c0_290 = arith.constant 0 : index
    %c0_291 = arith.constant 0 : index
    %377 = vector.load %arg1[%c7_288, %c2_289, %c0_290, %c0_291] : memref<8x4x2x32xf32, #tpu.memory_space<vmem>>, vector<1x1x2x32xf32>
    %378 = vector.shape_cast %377 : vector<1x1x2x32xf32> to vector<2x32xf32>
    %379 = arith.addf %378, %357 : vector<2x32xf32>
    %380 = math.tanh %379 : vector<2x32xf32>
    %c7_292 = arith.constant 7 : index
    %c3_293 = arith.constant 3 : index
    %c0_294 = arith.constant 0 : index
    %c0_295 = arith.constant 0 : index
    %381 = vector.load %arg1[%c7_292, %c3_293, %c0_294, %c0_295] : memref<8x4x2x32xf32, #tpu.memory_space<vmem>>, vector<1x1x2x32xf32>
    %382 = vector.shape_cast %381 : vector<1x1x2x32xf32> to vector<2x32xf32>
    %383 = arith.addf %382, %360 : vector<2x32xf32>
    %384 = arith.negf %383 : vector<2x32xf32>
    %385 = math.exp %384 : vector<2x32xf32>
    %cst_296 = arith.constant 1.000000e+00 : f32
    %386 = vector.broadcast %cst_296 : f32 to vector<2x32xf32>
    %387 = arith.addf %386, %385 : vector<2x32xf32>
    %388 = arith.divf %386, %387 : vector<2x32xf32>
    %389 = arith.mulf %376, %342 : vector<2x32xf32>
    %390 = arith.mulf %368, %380 : vector<2x32xf32>
    %391 = arith.addf %389, %390 : vector<2x32xf32>
    %392 = math.tanh %391 : vector<2x32xf32>
    %393 = arith.mulf %388, %392 : vector<2x32xf32>
    %c7_297 = arith.constant 7 : index
    %c0_298 = arith.constant 0 : index
    %c0_299 = arith.constant 0 : index
    %394 = vector.load %arg3[%c7_297, %c0_298, %c0_299] : memref<8x2x32xf32, #tpu.memory_space<vmem>>, vector<1x2x32xf32>
    %395 = vector.shape_cast %394 : vector<1x2x32xf32> to vector<2x32xf32>
    %396 = vector.shape_cast %393 : vector<2x32xf32> to vector<1x2x32xf32>
    tpu.vector_store %arg3[%c7_297, %c0_298, %c0_299], %396 {strides = array<i32>} : memref<8x2x32xf32, #tpu.memory_space<vmem>>, vector<1x2x32xf32>,
    %c0_300 = arith.constant 0 : index
    %c0_301 = arith.constant 0 : index
    %397 = vector.load %arg4[%c0_300, %c0_301] : memref<2x32xf32, #tpu.memory_space<vmem>>, vector<2x32xf32>
    tpu.vector_store %arg4[%c0_300, %c0_301], %393 {strides = array<i32>} : memref<2x32xf32, #tpu.memory_space<vmem>>, vector<2x32xf32>,
    %c0_302 = arith.constant 0 : index
    %c0_303 = arith.constant 0 : index
    %398 = vector.load %arg5[%c0_302, %c0_303] : memref<2x32xf32, #tpu.memory_space<vmem>>, vector<2x32xf32>
    tpu.vector_store %arg5[%c0_302, %c0_303], %391 {strides = array<i32>} : memref<2x32xf32, #tpu.memory_space<vmem>>, vector<2x32xf32>,
    return
  }
  func.func @transform_0(%arg0: i32) -> (i32, i32, i32, i32) {
    %c0_i32 = arith.constant 0 : i32
    %c0_i32_0 = arith.constant 0 : i32
    %c0_i32_1 = arith.constant 0 : i32
    %c0_i32_2 = arith.constant 0 : i32
    return %arg0, %c0_i32, %c0_i32_0, %c0_i32_1 : i32, i32, i32, i32
  }
  func.func @transform_1(%arg0: i32) -> (i32, i32, i32) {
    %c0_i32 = arith.constant 0 : i32
    %c0_i32_0 = arith.constant 0 : i32
    %c0_i32_1 = arith.constant 0 : i32
    %c0_i32_2 = arith.constant 0 : i32
    return %c0_i32, %c0_i32_0, %c0_i32_1 : i32, i32, i32
  }
  func.func @transform_2(%arg0: i32) -> (i32, i32, i32) {
    %c0_i32 = arith.constant 0 : i32
    %c0_i32_0 = arith.constant 0 : i32
    %c0_i32_1 = arith.constant 0 : i32
    return %arg0, %c0_i32, %c0_i32_0 : i32, i32, i32
  }
}

</mosaic_0001>

<llo_original>
// kernel: tpu_custom_call.1
$region0: #{tpu_custom_call.1}
  #allocation0 [shape = 'u32[]', space=smem, size = 0x4, offset = 0x4, fixed_abs, tag = 'smem constant byte address 0x4 - core index']
  #allocation1 [shape = 'u32[72,128]{1,0:T(1,128)}', space=vmem, size = 0x9000, scoped, tag = 'internal scratch']
  #allocation2 [shape = 'f32[2,32]{1,0:T(2,128)}', space=vmem, size = 0x400, scoped, tag = 'scratch operand']
  #allocation3 [shape = 'f32[2,32]{1,0:T(2,128)}', space=vmem, size = 0x400, scoped, tag = 'scratch operand']
  %s0 = inlined_call_operand.hbm [shape: f32[8,4,2,32], index: 0, kind: input, shape index: {}]
  %s1 = inlined_call_operand.hbm [shape: bf16[4,32,32], index: 1, kind: input, shape index: {}]
  %s2 = inlined_call_operand.hbm [shape: f32[8,2,32], index: 2, kind: output, shape index: {}]
  %s3 = sld [smem:[#allocation0]]
  $region30: #{tpu_custom_call.1} parent=0
    _
  %s5 = ssub.s32 1, %s3
  %s6 = scalar_select 0, %s5, %s3
  $region1: #{tpu_custom_call.1} parent=0
    #allocation4 [shape = 'u8[32768]{0}', space=vmem, size = 0x8000, scoped, tag = 'input window, operand 0, single buffered']
    #allocation5 [shape = 's32[1]{0}', space=sflag, size = 0x4, scoped, tag = 'scoped memory for tpu_custom_call.1']
    #allocation6 [shape = 's32[1]{0}', space=sflag, size = 0x4, scoped, tag = 'scoped memory for tpu_custom_call.1']
    #allocation7 [shape = 'u8[32768]{0}', space=vmem, size = 0x8000, scoped, tag = 'input window, operand 1, single buffered']
    #allocation8 [shape = 's32[1]{0}', space=sflag, size = 0x4, scoped, tag = 'scoped memory for tpu_custom_call.1']
    #allocation9 [shape = 'u8[8192]{0}', space=vmem, size = 0x2000, scoped, tag = 'output window, operand 0, single buffered']
    %7 = vsyncpa [#allocation5], 0
    %8 = vsyncpa [#allocation8], 0
    %9 = vsyncpa [#allocation6], 0
    // Predicated region
    $region2: #{tpu_custom_call.1} parent=1 // pred_check
      _
    $region3: #{tpu_custom_call.1} parent=1 // pred_check_branch
      %11 = sbr.rel (0) target = $region5
    $region4: #{tpu_custom_call.1} parent=1 // pred_region
      %13 = vsyncadd [#allocation5], 0
      %s14 = sshll.u32 %s0, 4
      %s15 = int_to_ptr.hbm [resolvable:$true] %s14
      %s16 = sshll.u32 [#allocation4], 4
      %s17 = int_to_ptr.vmem [resolvable:$true] %s16
      %22 = dma.hbm_to_vmem [thread:$0]  %s15, 1024, %s17, [#allocation5], 32, 32, 2
    $region5: #{tpu_custom_call.1} parent=1 // pred_fallthru
      _
    // Predicated region
    $region6: #{tpu_custom_call.1} parent=1 // pred_check
      _
    $region7: #{tpu_custom_call.1} parent=1 // pred_check_branch
      %24 = sbr.rel (0) target = $region9
    $region8: #{tpu_custom_call.1} parent=1 // pred_region
      %26 = vsyncadd [#allocation8], 0
      %s27 = sshll.u32 %s1, 4
      %s28 = int_to_ptr.hbm [resolvable:$true] %s27
      %s29 = sshll.u32 [#allocation7], 4
      %s30 = int_to_ptr.vmem [resolvable:$true] %s29
      %35 = dma.hbm_to_vmem [thread:$0]  %s28, 1024, %s30, [#allocation8], 64, 64, 4
    $region9: #{tpu_custom_call.1} parent=1 // pred_fallthru
      _
    // Predicated region
    $region10: #{tpu_custom_call.1} parent=1 // pred_check
      _
    $region11: #{tpu_custom_call.1} parent=1 // pred_check_branch
      %37 = sbr.rel (0) target = $region13
    $region12: #{tpu_custom_call.1} parent=1 // pred_region
      %39 = dma.done [#allocation5], 1024
    $region13: #{tpu_custom_call.1} parent=1 // pred_fallthru
      _
    // Predicated region
    $region14: #{tpu_custom_call.1} parent=1 // pred_check
      _
    $region15: #{tpu_custom_call.1} parent=1 // pred_check_branch
      %41 = sbr.rel (0) target = $region17
    $region16: #{tpu_custom_call.1} parent=1 // pred_region
      %43 = dma.done [#allocation8], 1024
    $region17: #{tpu_custom_call.1} parent=1 // pred_fallthru
      _
    %p45 = scmp.eq.s32.totalorder 0, 0
    // Predicated region
    $region18: #{tpu_custom_call.1} parent=1 // pred_check
      %p46 = pneg %p45
    $region19: #{tpu_custom_call.1} parent=1 // pred_check_branch
      %48 = sbr.rel (%p46) target = $region21
    $region20: #{tpu_custom_call.1} parent=1 // pred_region
      %vm49 = vcmask 254976
      %50 = vst.msk [vmem:[#allocation2] sm:$0x3] %vm49, 0.0
      %51 = vst.msk [vmem:[#allocation3] sm:$0x3] %vm49, 0.0
    $region21: #{tpu_custom_call.1} parent=1 // pred_fallthru
      _
    %v52 = vld [vmem:[#allocation2] sm:$0x3]
    %v53 = vld [vmem:[#allocation3] sm:$0x3]
    %v54 = vpack.c.bf16 %v52, %v52
    %v55 = vld [vmem:[#allocation7] sm:$0xf]
    %v56 = vld [vmem:[#allocation7 + $0x4] sm:$0xf]
    %v57 = vld [vmem:[#allocation7 + $0x8] sm:$0xf]
    %v58 = vld [vmem:[#allocation7 + $0xc] sm:$0xf]
    %v63 = vunpack.c.l.b16 %v55
    %v64 = vunpack.c.l.b16 %v56
    %v65 = vunpack.c.l.b16 %v57
    %v66 = vunpack.c.l.b16 %v58
    %v67 = vpack.c.b16 %v64, %v63
    %v68 = vpack.c.b16 %v66, %v65
    %vm71 = vcmask 261120
    %v73 = vsel %vm71, %v54, 0
    %75 = vmatpush.bf16.msra.mxu0 0
    %76 = vmatpush.bf16.msra.mxu0 0
    %77 = vmatpush.bf16.msra.mxu0 0
    %78 = vmatpush.bf16.msra.mxu0 0
    %79 = vmatpush.bf16.msra.mxu0 0
    %80 = vmatpush.bf16.msra.mxu0 0
    %81 = vmatpush.bf16.msra.mxu0 %v68
    %82 = vmatpush.bf16.msra.mxu0 %v67
    %83 = vmatmul.bf16.gmra.mxu0 %v73
    %v84 = vpop.f32.mrf.mxu0
    %v85 = vadd.f32 0.0, %v84
    %v86 = vpop.f32.mrf.mxu0
    %87 = vdwg.mxu0
    %s88 = scalar_lea.vmem [#allocation7], 16
    %v89 = vld [vmem:[%s88] sm:$0xf]
    %v90 = vld [vmem:[%s88 + $0x4] sm:$0xf]
    %v91 = vld [vmem:[%s88 + $0x8] sm:$0xf]
    %v92 = vld [vmem:[%s88 + $0xc] sm:$0xf]
    %v97 = vunpack.c.l.b16 %v89
    %v98 = vunpack.c.l.b16 %v90
    %v99 = vunpack.c.l.b16 %v91
    %v100 = vunpack.c.l.b16 %v92
    %v101 = vpack.c.b16 %v98, %v97
    %v102 = vpack.c.b16 %v100, %v99
    %105 = vmatpush.bf16.msra.mxu0 0
    %106 = vmatpush.bf16.msra.mxu0 0
    %107 = vmatpush.bf16.msra.mxu0 0
    %108 = vmatpush.bf16.msra.mxu0 0
    %109 = vmatpush.bf16.msra.mxu0 0
    %110 = vmatpush.bf16.msra.mxu0 0
    %111 = vmatpush.bf16.msra.mxu0 %v102
    %112 = vmatpush.bf16.msra.mxu0 %v101
    %113 = vmatmul.bf16.gmra.mxu0 %v73
    %v114 = vpop.f32.mrf.mxu0
    %v115 = vadd.f32 0.0, %v114
    %v116 = vpop.f32.mrf.mxu0
    %117 = vdwg.mxu0
    %s118 = scalar_lea.vmem [#allocation7], 32
    %v119 = vld [vmem:[%s118] sm:$0xf]
    %v120 = vld [vmem:[%s118 + $0x4] sm:$0xf]
    %v121 = vld [vmem:[%s118 + $0x8] sm:$0xf]
    %v122 = vld [vmem:[%s118 + $0xc] sm:$0xf]
    %v127 = vunpack.c.l.b16 %v119
    %v128 = vunpack.c.l.b16 %v120
    %v129 = vunpack.c.l.b16 %v121
    %v130 = vunpack.c.l.b16 %v122
    %v131 = vpack.c.b16 %v128, %v127
    %v132 = vpack.c.b16 %v130, %v129
    %135 = vmatpush.bf16.msra.mxu0 0
    %136 = vmatpush.bf16.msra.mxu0 0
    %137 = vmatpush.bf16.msra.mxu0 0
    %138 = vmatpush.bf16.msra.mxu0 0
    %139 = vmatpush.bf16.msra.mxu0 0
    %140 = vmatpush.bf16.msra.mxu0 0
    %141 = vmatpush.bf16.msra.mxu0 %v132
    %142 = vmatpush.bf16.msra.mxu0 %v131
    %143 = vmatmul.bf16.gmra.mxu0 %v73
    %v144 = vpop.f32.mrf.mxu0
    %v145 = vadd.f32 0.0, %v144
    %v146 = vpop.f32.mrf.mxu0
    %147 = vdwg.mxu0
    %s148 = scalar_lea.vmem [#allocation7], 48
    %v149 = vld [vmem:[%s148] sm:$0xf]
    %v150 = vld [vmem:[%s148 + $0x4] sm:$0xf]
    %v151 = vld [vmem:[%s148 + $0x8] sm:$0xf]
    %v152 = vld [vmem:[%s148 + $0xc] sm:$0xf]
    %v157 = vunpack.c.l.b16 %v149
    %v158 = vunpack.c.l.b16 %v150
    %v159 = vunpack.c.l.b16 %v151
    %v160 = vunpack.c.l.b16 %v152
    %v161 = vpack.c.b16 %v158, %v157
    %v162 = vpack.c.b16 %v160, %v159
    %165 = vmatpush.bf16.msra.mxu0 0
    %166 = vmatpush.bf16.msra.mxu0 0
    %167 = vmatpush.bf16.msra.mxu0 0
    %168 = vmatpush.bf16.msra.mxu0 0
    %169 = vmatpush.bf16.msra.mxu0 0
    %170 = vmatpush.bf16.msra.mxu0 0
    %171 = vmatpush.bf16.msra.mxu0 %v162
    %172 = vmatpush.bf16.msra.mxu0 %v161
    %173 = vmatmul.bf16.gmra.mxu0 %v73
    %v174 = vpop.f32.mrf.mxu0
    %v175 = vadd.f32 0.0, %v174
    %v176 = vpop.f32.mrf.mxu0
    %177 = vdwg.mxu0
    %v178 = vld [vmem:[#allocation4] sm:$0x3]
    %v179 = vadd.f32 %v178, %v85
    %v180 = vxor.u32 %v179, 2147483648
    %v181 = vmul.f32 %v180, 1.442695
    %v182 = vpow.pop %v181
    %v183 = vadd.f32 %v182, 1.0
    %v184 = vrcp.pop %v183
    %v185 = vmul.f32 %v183, %v184
    %v186 = vsub.f32 1.0, %v185
    %v187 = vmul.f32 %v184, %v186
    %v188 = vadd.f32 %v184, %v187
    %vm189 = vweird.f32 %v183
    %vm190 = vweird.f32 %v184
    %vm191 = vmor %vm189, %vm190
    %v192 = vsel %vm191, %v184, %v188
    %v193 = vand.u32 2147483647, %v183
    %vm194 = vcmp.eq.f32.partialorder %v193, 8.507059e+37
    %v195 = vand.u32 %v183, 2147483648
    %v196 = vor.u32 1.1754944e-38, %v195
    %v197 = vsel %vm194, %v196, %v192
    %v198 = vmul.f32 1.0, %v197
    %s199 = scalar_lea.vmem [#allocation4], 2
    %v200 = vld [vmem:[%s199] sm:$0x3]
    %v201 = vadd.f32 %v200, %v115
    %v202 = vxor.u32 %v201, 2147483648
    %v203 = vmul.f32 %v202, 1.442695
    %v204 = vpow.pop %v203
    %v205 = vadd.f32 %v204, 1.0
    %v206 = vrcp.pop %v205
    %v207 = vmul.f32 %v205, %v206
    %v208 = vsub.f32 1.0, %v207
    %v209 = vmul.f32 %v206, %v208
    %v210 = vadd.f32 %v206, %v209
    %vm211 = vweird.f32 %v205
    %vm212 = vweird.f32 %v206
    %vm213 = vmor %vm211, %vm212
    %v214 = vsel %vm213, %v206, %v210
    %v215 = vand.u32 2147483647, %v205
    %vm216 = vcmp.eq.f32.partialorder %v215, 8.507059e+37
    %v217 = vand.u32 %v205, 2147483648
    %v218 = vor.u32 1.1754944e-38, %v217
    %v219 = vsel %vm216, %v218, %v214
    %v220 = vmul.f32 1.0, %v219
    %s221 = scalar_lea.vmem [#allocation4], 4
    %v222 = vld [vmem:[%s221] sm:$0x3]
    %v223 = vadd.f32 %v222, %v145
    %v224 = vtanh.pop %v223
    %s225 = scalar_lea.vmem [#allocation4], 6
    %v226 = vld [vmem:[%s225] sm:$0x3]
    %v227 = vadd.f32 %v226, %v175
    %v228 = vxor.u32 %v227, 2147483648
    %v229 = vmul.f32 %v228, 1.442695
    %v230 = vpow.pop %v229
    %v231 = vadd.f32 %v230, 1.0
    %v232 = vrcp.pop %v231
    %v233 = vmul.f32 %v231, %v232
    %v234 = vsub.f32 1.0, %v233
    %v235 = vmul.f32 %v232, %v234
    %v236 = vadd.f32 %v232, %v235
    %vm237 = vweird.f32 %v231
    %vm238 = vweird.f32 %v232
    %vm239 = vmor %vm237, %vm238
    %v240 = vsel %vm239, %v232, %v236
    %v241 = vand.u32 2147483647, %v231
    %vm242 = vcmp.eq.f32.partialorder %v241, 8.507059e+37
    %v243 = vand.u32 %v231, 2147483648
    %v244 = vor.u32 1.1754944e-38, %v243
    %v245 = vsel %vm242, %v244, %v240
    %v246 = vmul.f32 1.0, %v245
    %v247 = vmul.f32 %v220, %v53
    %v248 = vmul.f32 %v198, %v224
    %v249 = vadd.f32 %v247, %v248
    %v250 = vtanh.pop %v249
    %v251 = vmul.f32 %v246, %v250
    %vm252 = vcmask 254976
    %253 = vst.msk [vmem:[#allocation9] sm:$0x3] %vm252, %v251
    %v254 = vpack.c.bf16 %v251, %v251
    %v255 = vld [vmem:[#allocation7] sm:$0xf]
    %v256 = vld [vmem:[#allocation7 + $0x4] sm:$0xf]
    %v257 = vld [vmem:[#allocation7 + $0x8] sm:$0xf]
    %v258 = vld [vmem:[#allocation7 + $0xc] sm:$0xf]
    %v263 = vunpack.c.l.b16 %v255
    %v264 = vunpack.c.l.b16 %v256
    %v265 = vunpack.c.l.b16 %v257
    %v266 = vunpack.c.l.b16 %v258
    %v267 = vpack.c.b16 %v264, %v263
    %v268 = vpack.c.b16 %v266, %v265
    %v272 = vsel %vm71, %v254, 0
    %274 = vmatpush.bf16.msra.mxu0 0
    %275 = vmatpush.bf16.msra.mxu0 0
    %276 = vmatpush.bf16.msra.mxu0 0
    %277 = vmatpush.bf16.msra.mxu0 0
    %278 = vmatpush.bf16.msra.mxu0 0
    %279 = vmatpush.bf16.msra.mxu0 0
    %280 = vmatpush.bf16.msra.mxu0 %v268
    %281 = vmatpush.bf16.msra.mxu0 %v267
    %282 = vmatmul.bf16.gmra.mxu0 %v272
    %v283 = vpop.f32.mrf.mxu0
    %v284 = vadd.f32 0.0, %v283
    %v285 = vpop.f32.mrf.mxu0
    %286 = vdwg.mxu0
    %v287 = vld [vmem:[%s88] sm:$0xf]
    %v288 = vld [vmem:[%s88 + $0x4] sm:$0xf]
    %v289 = vld [vmem:[%s88 + $0x8] sm:$0xf]
    %v290 = vld [vmem:[%s88 + $0xc] sm:$0xf]
    %v295 = vunpack.c.l.b16 %v287
    %v296 = vunpack.c.l.b16 %v288
    %v297 = vunpack.c.l.b16 %v289
    %v298 = vunpack.c.l.b16 %v290
    %v299 = vpack.c.b16 %v296, %v295
    %v300 = vpack.c.b16 %v298, %v297
    %303 = vmatpush.bf16.msra.mxu0 0
    %304 = vmatpush.bf16.msra.mxu0 0
    %305 = vmatpush.bf16.msra.mxu0 0
    %306 = vmatpush.bf16.msra.mxu0 0
    %307 = vmatpush.bf16.msra.mxu0 0
    %308 = vmatpush.bf16.msra.mxu0 0
    %309 = vmatpush.bf16.msra.mxu0 %v300
    %310 = vmatpush.bf16.msra.mxu0 %v299
    %311 = vmatmul.bf16.gmra.mxu0 %v272
    %v312 = vpop.f32.mrf.mxu0
    %v313 = vadd.f32 0.0, %v312
    %v314 = vpop.f32.mrf.mxu0
    %315 = vdwg.mxu0
    %v316 = vld [vmem:[%s118] sm:$0xf]
    %v317 = vld [vmem:[%s118 + $0x4] sm:$0xf]
    %v318 = vld [vmem:[%s118 + $0x8] sm:$0xf]
    %v319 = vld [vmem:[%s118 + $0xc] sm:$0xf]
    %v324 = vunpack.c.l.b16 %v316
    %v325 = vunpack.c.l.b16 %v317
    %v326 = vunpack.c.l.b16 %v318
    %v327 = vunpack.c.l.b16 %v319
    %v328 = vpack.c.b16 %v325, %v324
    %v329 = vpack.c.b16 %v327, %v326
    %332 = vmatpush.bf16.msra.mxu0 0
    %333 = vmatpush.bf16.msra.mxu0 0
    %334 = vmatpush.bf16.msra.mxu0 0
    %335 = vmatpush.bf16.msra.mxu0 0
    %336 = vmatpush.bf16.msra.mxu0 0
    %337 = vmatpush.bf16.msra.mxu0 0
    %338 = vmatpush.bf16.msra.mxu0 %v329
    %339 = vmatpush.bf16.msra.mxu0 %v328
    %340 = vmatmul.bf16.gmra.mxu0 %v272
    %v341 = vpop.f32.mrf.mxu0
    %v342 = vadd.f32 0.0, %v341
    %v343 = vpop.f32.mrf.mxu0
    %344 = vdwg.mxu0
    %v345 = vld [vmem:[%s148] sm:$0xf]
    %v346 = vld [vmem:[%s148 + $0x4] sm:$0xf]
    %v347 = vld [vmem:[%s148 + $0x8] sm:$0xf]
    %v348 = vld [vmem:[%s148 + $0xc] sm:$0xf]
    %v353 = vunpack.c.l.b16 %v345
    %v354 = vunpack.c.l.b16 %v346
    %v355 = vunpack.c.l.b16 %v347
    %v356 = vunpack.c.l.b16 %v348
    %v357 = vpack.c.b16 %v354, %v353
    %v358 = vpack.c.b16 %v356, %v355
    %361 = vmatpush.bf16.msra.mxu0 0
    %362 = vmatpush.bf16.msra.mxu0 0
    %363 = vmatpush.bf16.msra.mxu0 0
    %364 = vmatpush.bf16.msra.mxu0 0
    %365 = vmatpush.bf16.msra.mxu0 0
    %366 = vmatpush.bf16.msra.mxu0 0
    %367 = vmatpush.bf16.msra.mxu0 %v358
    %368 = vmatpush.bf16.msra.mxu0 %v357
    %369 = vmatmul.bf16.gmra.mxu0 %v272
    %v370 = vpop.f32.mrf.mxu0
    %v371 = vadd.f32 0.0, %v370
    %v372 = vpop.f32.mrf.mxu0
    %373 = vdwg.mxu0
    %s374 = scalar_lea.vmem [#allocation4], 8
    %v375 = vld [vmem:[%s374] sm:$0x3]
    %v376 = vadd.f32 %v375, %v284
    %v377 = vxor.u32 %v376, 2147483648
    %v378 = vmul.f32 %v377, 1.442695
    %v379 = vpow.pop %v378
    %v380 = vadd.f32 %v379, 1.0
    %v381 = vrcp.pop %v380
    %v382 = vmul.f32 %v380, %v381
    %v383 = vsub.f32 1.0, %v382
    %v384 = vmul.f32 %v381, %v383
    %v385 = vadd.f32 %v381, %v384
    %vm386 = vweird.f32 %v380
    %vm387 = vweird.f32 %v381
    %vm388 = vmor %vm386, %vm387
    %v389 = vsel %vm388, %v381, %v385
    %v390 = vand.u32 2147483647, %v380
    %vm391 = vcmp.eq.f32.partialorder %v390, 8.507059e+37
    %v392 = vand.u32 %v380, 2147483648
    %v393 = vor.u32 1.1754944e-38, %v392
    %v394 = vsel %vm391, %v393, %v389
    %v395 = vmul.f32 1.0, %v394
    %s396 = scalar_lea.vmem [#allocation4], 10
    %v397 = vld [vmem:[%s396] sm:$0x3]
    %v398 = vadd.f32 %v397, %v313
    %v399 = vxor.u32 %v398, 2147483648
    %v400 = vmul.f32 %v399, 1.442695
    %v401 = vpow.pop %v400
    %v402 = vadd.f32 %v401, 1.0
    %v403 = vrcp.pop %v402
    %v404 = vmul.f32 %v402, %v403
    %v405 = vsub.f32 1.0, %v404
    %v406 = vmul.f32 %v403, %v405
    %v407 = vadd.f32 %v403, %v406
    %vm408 = vweird.f32 %v402
    %vm409 = vweird.f32 %v403
    %vm410 = vmor %vm408, %vm409
    %v411 = vsel %vm410, %v403, %v407
    %v412 = vand.u32 2147483647, %v402
    %vm413 = vcmp.eq.f32.partialorder %v412, 8.507059e+37
    %v414 = vand.u32 %v402, 2147483648
    %v415 = vor.u32 1.1754944e-38, %v414
    %v416 = vsel %vm413, %v415, %v411
    %v417 = vmul.f32 1.0, %v416
    %s418 = scalar_lea.vmem [#allocation4], 12
    %v419 = vld [vmem:[%s418] sm:$0x3]
    %v420 = vadd.f32 %v419, %v342
    %v421 = vtanh.pop %v420
    %s422 = scalar_lea.vmem [#allocation4], 14
    %v423 = vld [vmem:[%s422] sm:$0x3]
    %v424 = vadd.f32 %v423, %v371
    %v425 = vxor.u32 %v424, 2147483648
    %v426 = vmul.f32 %v425, 1.442695
    %v427 = vpow.pop %v426
    %v428 = vadd.f32 %v427, 1.0
    %v429 = vrcp.pop %v428
    %v430 = vmul.f32 %v428, %v429
    %v431 = vsub.f32 1.0, %v430
    %v432 = vmul.f32 %v429, %v431
    %v433 = vadd.f32 %v429, %v432
    %vm434 = vweird.f32 %v428
    %vm435 = vweird.f32 %v429
    %vm436 = vmor %vm434, %vm435
    %v437 = vsel %vm436, %v429, %v433
    %v438 = vand.u32 2147483647, %v428
    %vm439 = vcmp.eq.f32.partialorder %v438, 8.507059e+37
    %v440 = vand.u32 %v428, 2147483648
    %v441 = vor.u32 1.1754944e-38, %v440
    %v442 = vsel %vm439, %v441, %v437
    %v443 = vmul.f32 1.0, %v442
    %v444 = vmul.f32 %v417, %v249
    %v445 = vmul.f32 %v395, %v421
    %v446 = vadd.f32 %v444, %v445
    %v447 = vtanh.pop %v446
    %v448 = vmul.f32 %v443, %v447
    %s449 = scalar_lea.vmem [#allocation9], 2
    %450 = vst.msk [vmem:[%s449] sm:$0x3] %vm252, %v448
    %v451 = vpack.c.bf16 %v448, %v448
    %v452 = vld [vmem:[#allocation7] sm:$0xf]
    %v453 = vld [vmem:[#allocation7 + $0x4] sm:$0xf]
    %v454 = vld [vmem:[#allocation7 + $0x8] sm:$0xf]
    %v455 = vld [vmem:[#allocation7 + $0xc] sm:$0xf]
    %v460 = vunpack.c.l.b16 %v452
    %v461 = vunpack.c.l.b16 %v453
    %v462 = vunpack.c.l.b16 %v454
    %v463 = vunpack.c.l.b16 %v455
    %v464 = vpack.c.b16 %v461, %v460
    %v465 = vpack.c.b16 %v463, %v462
    %v469 = vsel %vm71, %v451, 0
    %471 = vmatpush.bf16.msra.mxu0 0
    %472 = vmatpush.bf16.msra.mxu0 0
    %473 = vmatpush.bf16.msra.mxu0 0
    %474 = vmatpush.bf16.msra.mxu0 0
    %475 = vmatpush.bf16.msra.mxu0 0
    %476 = vmatpush.bf16.msra.mxu0 0
    %477 = vmatpush.bf16.msra.mxu0 %v465
    %478 = vmatpush.bf16.msra.mxu0 %v464
    %479 = vmatmul.bf16.gmra.mxu0 %v469
    %v480 = vpop.f32.mrf.mxu0
    %v481 = vadd.f32 0.0, %v480
    %v482 = vpop.f32.mrf.mxu0
    %483 = vdwg.mxu0
    %v484 = vld [vmem:[%s88] sm:$0xf]
    %v485 = vld [vmem:[%s88 + $0x4] sm:$0xf]
    %v486 = vld [vmem:[%s88 + $0x8] sm:$0xf]
    %v487 = vld [vmem:[%s88 + $0xc] sm:$0xf]
    %v492 = vunpack.c.l.b16 %v484
    %v493 = vunpack.c.l.b16 %v485
    %v494 = vunpack.c.l.b16 %v486
    %v495 = vunpack.c.l.b16 %v487
    %v496 = vpack.c.b16 %v493, %v492
    %v497 = vpack.c.b16 %v495, %v494
    %500 = vmatpush.bf16.msra.mxu0 0
    %501 = vmatpush.bf16.msra.mxu0 0
    %502 = vmatpush.bf16.msra.mxu0 0
    %503 = vmatpush.bf16.msra.mxu0 0
    %504 = vmatpush.bf16.msra.mxu0 0
    %505 = vmatpush.bf16.msra.mxu0 0
    %506 = vmatpush.bf16.msra.mxu0 %v497
    %507 = vmatpush.bf16.msra.mxu0 %v496
    %508 = vmatmul.bf16.gmra.mxu0 %v469
    %v509 = vpop.f32.mrf.mxu0
    %v510 = vadd.f32 0.0, %v509
    %v511 = vpop.f32.mrf.mxu0
    %512 = vdwg.mxu0
    %v513 = vld [vmem:[%s118] sm:$0xf]
    %v514 = vld [vmem:[%s118 + $0x4] sm:$0xf]
    %v515 = vld [vmem:[%s118 + $0x8] sm:$0xf]
    %v516 = vld [vmem:[%s118 + $0xc] sm:$0xf]
    %v521 = vunpack.c.l.b16 %v513
    %v522 = vunpack.c.l.b16 %v514
    %v523 = vunpack.c.l.b16 %v515
    %v524 = vunpack.c.l.b16 %v516
    %v525 = vpack.c.b16 %v522, %v521
    %v526 = vpack.c.b16 %v524, %v523
    %529 = vmatpush.bf16.msra.mxu0 0
    %530 = vmatpush.bf16.msra.mxu0 0
    %531 = vmatpush.bf16.msra.mxu0 0
    %532 = vmatpush.bf16.msra.mxu0 0
    %533 = vmatpush.bf16.msra.mxu0 0
    %534 = vmatpush.bf16.msra.mxu0 0
    %535 = vmatpush.bf16.msra.mxu0 %v526
    %536 = vmatpush.bf16.msra.mxu0 %v525
    %537 = vmatmul.bf16.gmra.mxu0 %v469
    %v538 = vpop.f32.mrf.mxu0
    %v539 = vadd.f32 0.0, %v538
    %v540 = vpop.f32.mrf.mxu0
    %541 = vdwg.mxu0
    %v542 = vld [vmem:[%s148] sm:$0xf]
    %v543 = vld [vmem:[%s148 + $0x4] sm:$0xf]
    %v544 = vld [vmem:[%s148 + $0x8] sm:$0xf]
    %v545 = vld [vmem:[%s148 + $0xc] sm:$0xf]
    %v550 = vunpack.c.l.b16 %v542
    %v551 = vunpack.c.l.b16 %v543
    %v552 = vunpack.c.l.b16 %v544
    %v553 = vunpack.c.l.b16 %v545
    %v554 = vpack.c.b16 %v551, %v550
    %v555 = vpack.c.b16 %v553, %v552
    %558 = vmatpush.bf16.msra.mxu0 0
    %559 = vmatpush.bf16.msra.mxu0 0
    %560 = vmatpush.bf16.msra.mxu0 0
    %561 = vmatpush.bf16.msra.mxu0 0
    %562 = vmatpush.bf16.msra.mxu0 0
    %563 = vmatpush.bf16.msra.mxu0 0
    %564 = vmatpush.bf16.msra.mxu0 %v555
    %565 = vmatpush.bf16.msra.mxu0 %v554
    %566 = vmatmul.bf16.gmra.mxu0 %v469
    %v567 = vpop.f32.mrf.mxu0
    %v568 = vadd.f32 0.0, %v567
    %v569 = vpop.f32.mrf.mxu0
    %570 = vdwg.mxu0
    %s571 = scalar_lea.vmem [#allocation4], 16
    %v572 = vld [vmem:[%s571] sm:$0x3]
    %v573 = vadd.f32 %v572, %v481
    %v574 = vxor.u32 %v573, 2147483648
    %v575 = vmul.f32 %v574, 1.442695
    %v576 = vpow.pop %v575
    %v577 = vadd.f32 %v576, 1.0
    %v578 = vrcp.pop %v577
    %v579 = vmul.f32 %v577, %v578
    %v580 = vsub.f32 1.0, %v579
    %v581 = vmul.f32 %v578, %v580
    %v582 = vadd.f32 %v578, %v581
    %vm583 = vweird.f32 %v577
    %vm584 = vweird.f32 %v578
    %vm585 = vmor %vm583, %vm584
    %v586 = vsel %vm585, %v578, %v582
    %v587 = vand.u32 2147483647, %v577
    %vm588 = vcmp.eq.f32.partialorder %v587, 8.507059e+37
    %v589 = vand.u32 %v577, 2147483648
    %v590 = vor.u32 1.1754944e-38, %v589
    %v591 = vsel %vm588, %v590, %v586
    %v592 = vmul.f32 1.0, %v591
    %s593 = scalar_lea.vmem [#allocation4], 18
    %v594 = vld [vmem:[%s593] sm:$0x3]
    %v595 = vadd.f32 %v594, %v510
    %v596 = vxor.u32 %v595, 2147483648
    %v597 = vmul.f32 %v596, 1.442695
    %v598 = vpow.pop %v597
    %v599 = vadd.f32 %v598, 1.0
    %v600 = vrcp.pop %v599
    %v601 = vmul.f32 %v599, %v600
    %v602 = vsub.f32 1.0, %v601
    %v603 = vmul.f32 %v600, %v602
    %v604 = vadd.f32 %v600, %v603
    %vm605 = vweird.f32 %v599
    %vm606 = vweird.f32 %v600
    %vm607 = vmor %vm605, %vm606
    %v608 = vsel %vm607, %v600, %v604
    %v609 = vand.u32 2147483647, %v599
    %vm610 = vcmp.eq.f32.partialorder %v609, 8.507059e+37
    %v611 = vand.u32 %v599, 2147483648
    %v612 = vor.u32 1.1754944e-38, %v611
    %v613 = vsel %vm610, %v612, %v608
    %v614 = vmul.f32 1.0, %v613
    %s615 = scalar_lea.vmem [#allocation4], 20
    %v616 = vld [vmem:[%s615] sm:$0x3]
    %v617 = vadd.f32 %v616, %v539
    %v618 = vtanh.pop %v617
    %s619 = scalar_lea.vmem [#allocation4], 22
    %v620 = vld [vmem:[%s619] sm:$0x3]
    %v621 = vadd.f32 %v620, %v568
    %v622 = vxor.u32 %v621, 2147483648
    %v623 = vmul.f32 %v622, 1.442695
    %v624 = vpow.pop %v623
    %v625 = vadd.f32 %v624, 1.0
    %v626 = vrcp.pop %v625
    %v627 = vmul.f32 %v625, %v626
    %v628 = vsub.f32 1.0, %v627
    %v629 = vmul.f32 %v626, %v628
    %v630 = vadd.f32 %v626, %v629
    %vm631 = vweird.f32 %v625
    %vm632 = vweird.f32 %v626
    %vm633 = vmor %vm631, %vm632
    %v634 = vsel %vm633, %v626, %v630
    %v635 = vand.u32 2147483647, %v625
    %vm636 = vcmp.eq.f32.partialorder %v635, 8.507059e+37
    %v637 = vand.u32 %v625, 2147483648
    %v638 = vor.u32 1.1754944e-38, %v637
    %v639 = vsel %vm636, %v638, %v634
    %v640 = vmul.f32 1.0, %v639
    %v641 = vmul.f32 %v614, %v446
    %v642 = vmul.f32 %v592, %v618
    %v643 = vadd.f32 %v641, %v642
    %v644 = vtanh.pop %v643
    %v645 = vmul.f32 %v640, %v644
    %s646 = scalar_lea.vmem [#allocation9], 4
    %647 = vst.msk [vmem:[%s646] sm:$0x3] %vm252, %v645
    %v648 = vpack.c.bf16 %v645, %v645
    %v649 = vld [vmem:[#allocation7] sm:$0xf]
    %v650 = vld [vmem:[#allocation7 + $0x4] sm:$0xf]
    %v651 = vld [vmem:[#allocation7 + $0x8] sm:$0xf]
    %v652 = vld [vmem:[#allocation7 + $0xc] sm:$0xf]
    %v657 = vunpack.c.l.b16 %v649
    %v658 = vunpack.c.l.b16 %v650
    %v659 = vunpack.c.l.b16 %v651
    %v660 = vunpack.c.l.b16 %v652
    %v661 = vpack.c.b16 %v658, %v657
    %v662 = vpack.c.b16 %v660, %v659
    %v666 = vsel %vm71, %v648, 0
    %668 = vmatpush.bf16.msra.mxu0 0
    %669 = vmatpush.bf16.msra.mxu0 0
    %670 = vmatpush.bf16.msra.mxu0 0
    %671 = vmatpush.bf16.msra.mxu0 0
    %672 = vmatpush.bf16.msra.mxu0 0
    %673 = vmatpush.bf16.msra.mxu0 0
    %674 = vmatpush.bf16.msra.mxu0 %v662
    %675 = vmatpush.bf16.msra.mxu0 %v661
    %676 = vmatmul.bf16.gmra.mxu0 %v666
    %v677 = vpop.f32.mrf.mxu0
    %v678 = vadd.f32 0.0, %v677
    %v679 = vpop.f32.mrf.mxu0
    %680 = vdwg.mxu0
    %v681 = vld [vmem:[%s88] sm:$0xf]
    %v682 = vld [vmem:[%s88 + $0x4] sm:$0xf]
    %v683 = vld [vmem:[%s88 + $0x8] sm:$0xf]
    %v684 = vld [vmem:[%s88 + $0xc] sm:$0xf]
    %v689 = vunpack.c.l.b16 %v681
    %v690 = vunpack.c.l.b16 %v682
    %v691 = vunpack.c.l.b16 %v683
    %v692 = vunpack.c.l.b16 %v684
    %v693 = vpack.c.b16 %v690, %v689
    %v694 = vpack.c.b16 %v692, %v691
    %697 = vmatpush.bf16.msra.mxu0 0
    %698 = vmatpush.bf16.msra.mxu0 0
    %699 = vmatpush.bf16.msra.mxu0 0
    %700 = vmatpush.bf16.msra.mxu0 0
    %701 = vmatpush.bf16.msra.mxu0 0
    %702 = vmatpush.bf16.msra.mxu0 0
    %703 = vmatpush.bf16.msra.mxu0 %v694
    %704 = vmatpush.bf16.msra.mxu0 %v693
    %705 = vmatmul.bf16.gmra.mxu0 %v666
    %v706 = vpop.f32.mrf.mxu0
    %v707 = vadd.f32 0.0, %v706
    %v708 = vpop.f32.mrf.mxu0
    %709 = vdwg.mxu0
    %v710 = vld [vmem:[%s118] sm:$0xf]
    %v711 = vld [vmem:[%s118 + $0x4] sm:$0xf]
    %v712 = vld [vmem:[%s118 + $0x8] sm:$0xf]
    %v713 = vld [vmem:[%s118 + $0xc] sm:$0xf]
    %v718 = vunpack.c.l.b16 %v710
    %v719 = vunpack.c.l.b16 %v711
    %v720 = vunpack.c.l.b16 %v712
    %v721 = vunpack.c.l.b16 %v713
    %v722 = vpack.c.b16 %v719, %v718
    %v723 = vpack.c.b16 %v721, %v720
    %726 = vmatpush.bf16.msra.mxu0 0
    %727 = vmatpush.bf16.msra.mxu0 0
    %728 = vmatpush.bf16.msra.mxu0 0
    %729 = vmatpush.bf16.msra.mxu0 0
    %730 = vmatpush.bf16.msra.mxu0 0
    %731 = vmatpush.bf16.msra.mxu0 0
    %732 = vmatpush.bf16.msra.mxu0 %v723
    %733 = vmatpush.bf16.msra.mxu0 %v722
    %734 = vmatmul.bf16.gmra.mxu0 %v666
    %v735 = vpop.f32.mrf.mxu0
    %v736 = vadd.f32 0.0, %v735
    %v737 = vpop.f32.mrf.mxu0
    %738 = vdwg.mxu0
    %v739 = vld [vmem:[%s148] sm:$0xf]
    %v740 = vld [vmem:[%s148 + $0x4] sm:$0xf]
    %v741 = vld [vmem:[%s148 + $0x8] sm:$0xf]
    %v742 = vld [vmem:[%s148 + $0xc] sm:$0xf]
    %v747 = vunpack.c.l.b16 %v739
    %v748 = vunpack.c.l.b16 %v740
    %v749 = vunpack.c.l.b16 %v741
    %v750 = vunpack.c.l.b16 %v742
    %v751 = vpack.c.b16 %v748, %v747
    %v752 = vpack.c.b16 %v750, %v749
    %755 = vmatpush.bf16.msra.mxu0 0
    %756 = vmatpush.bf16.msra.mxu0 0
    %757 = vmatpush.bf16.msra.mxu0 0
    %758 = vmatpush.bf16.msra.mxu0 0
    %759 = vmatpush.bf16.msra.mxu0 0
    %760 = vmatpush.bf16.msra.mxu0 0
    %761 = vmatpush.bf16.msra.mxu0 %v752
    %762 = vmatpush.bf16.msra.mxu0 %v751
    %763 = vmatmul.bf16.gmra.mxu0 %v666
    %v764 = vpop.f32.mrf.mxu0
    %v765 = vadd.f32 0.0, %v764
    %v766 = vpop.f32.mrf.mxu0
    %767 = vdwg.mxu0
    %s768 = scalar_lea.vmem [#allocation4], 24
    %v769 = vld [vmem:[%s768] sm:$0x3]
    %v770 = vadd.f32 %v769, %v678
    %v771 = vxor.u32 %v770, 2147483648
    %v772 = vmul.f32 %v771, 1.442695
    %v773 = vpow.pop %v772
    %v774 = vadd.f32 %v773, 1.0
    %v775 = vrcp.pop %v774
    %v776 = vmul.f32 %v774, %v775
    %v777 = vsub.f32 1.0, %v776
    %v778 = vmul.f32 %v775, %v777
    %v779 = vadd.f32 %v775, %v778
    %vm780 = vweird.f32 %v774
    %vm781 = vweird.f32 %v775
    %vm782 = vmor %vm780, %vm781
    %v783 = vsel %vm782, %v775, %v779
    %v784 = vand.u32 2147483647, %v774
    %vm785 = vcmp.eq.f32.partialorder %v784, 8.507059e+37
    %v786 = vand.u32 %v774, 2147483648
    %v787 = vor.u32 1.1754944e-38, %v786
    %v788 = vsel %vm785, %v787, %v783
    %v789 = vmul.f32 1.0, %v788
    %s790 = scalar_lea.vmem [#allocation4], 26
    %v791 = vld [vmem:[%s790] sm:$0x3]
    %v792 = vadd.f32 %v791, %v707
    %v793 = vxor.u32 %v792, 2147483648
    %v794 = vmul.f32 %v793, 1.442695
    %v795 = vpow.pop %v794
    %v796 = vadd.f32 %v795, 1.0
    %v797 = vrcp.pop %v796
    %v798 = vmul.f32 %v796, %v797
    %v799 = vsub.f32 1.0, %v798
    %v800 = vmul.f32 %v797, %v799
    %v801 = vadd.f32 %v797, %v800
    %vm802 = vweird.f32 %v796
    %vm803 = vweird.f32 %v797
    %vm804 = vmor %vm802, %vm803
    %v805 = vsel %vm804, %v797, %v801
    %v806 = vand.u32 2147483647, %v796
    %vm807 = vcmp.eq.f32.partialorder %v806, 8.507059e+37
    %v808 = vand.u32 %v796, 2147483648
    %v809 = vor.u32 1.1754944e-38, %v808
    %v810 = vsel %vm807, %v809, %v805
    %v811 = vmul.f32 1.0, %v810
    %s812 = scalar_lea.vmem [#allocation4], 28
    %v813 = vld [vmem:[%s812] sm:$0x3]
    %v814 = vadd.f32 %v813, %v736
    %v815 = vtanh.pop %v814
    %s816 = scalar_lea.vmem [#allocation4], 30
    %v817 = vld [vmem:[%s816] sm:$0x3]
    %v818 = vadd.f32 %v817, %v765
    %v819 = vxor.u32 %v818, 2147483648
    %v820 = vmul.f32 %v819, 1.442695
    %v821 = vpow.pop %v820
    %v822 = vadd.f32 %v821, 1.0
    %v823 = vrcp.pop %v822
    %v824 = vmul.f32 %v822, %v823
    %v825 = vsub.f32 1.0, %v824
    %v826 = vmul.f32 %v823, %v825
    %v827 = vadd.f32 %v823, %v826
    %vm828 = vweird.f32 %v822
    %vm829 = vweird.f32 %v823
    %vm830 = vmor %vm828, %vm829
    %v831 = vsel %vm830, %v823, %v827
    %v832 = vand.u32 2147483647, %v822
    %vm833 = vcmp.eq.f32.partialorder %v832, 8.507059e+37
    %v834 = vand.u32 %v822, 2147483648
    %v835 = vor.u32 1.1754944e-38, %v834
    %v836 = vsel %vm833, %v835, %v831
    %v837 = vmul.f32 1.0, %v836
    %v838 = vmul.f32 %v811, %v643
    %v839 = vmul.f32 %v789, %v815
    %v840 = vadd.f32 %v838, %v839
    %v841 = vtanh.pop %v840
    %v842 = vmul.f32 %v837, %v841
    %s843 = scalar_lea.vmem [#allocation9], 6
    %844 = vst.msk [vmem:[%s843] sm:$0x3] %vm252, %v842
    %v845 = vpack.c.bf16 %v842, %v842
    %v846 = vld [vmem:[#allocation7] sm:$0xf]
    %v847 = vld [vmem:[#allocation7 + $0x4] sm:$0xf]
    %v848 = vld [vmem:[#allocation7 + $0x8] sm:$0xf]
    %v849 = vld [vmem:[#allocation7 + $0xc] sm:$0xf]
    %v854 = vunpack.c.l.b16 %v846
    %v855 = vunpack.c.l.b16 %v847
    %v856 = vunpack.c.l.b16 %v848
    %v857 = vunpack.c.l.b16 %v849
    %v858 = vpack.c.b16 %v855, %v854
    %v859 = vpack.c.b16 %v857, %v856
    %v863 = vsel %vm71, %v845, 0
    %865 = vmatpush.bf16.msra.mxu0 0
    %866 = vmatpush.bf16.msra.mxu0 0
    %867 = vmatpush.bf16.msra.mxu0 0
    %868 = vmatpush.bf16.msra.mxu0 0
    %869 = vmatpush.bf16.msra.mxu0 0
    %870 = vmatpush.bf16.msra.mxu0 0
    %871 = vmatpush.bf16.msra.mxu0 %v859
    %872 = vmatpush.bf16.msra.mxu0 %v858
    %873 = vmatmul.bf16.gmra.mxu0 %v863
    %v874 = vpop.f32.mrf.mxu0
    %v875 = vadd.f32 0.0, %v874
    %v876 = vpop.f32.mrf.mxu0
    %877 = vdwg.mxu0
    %v878 = vld [vmem:[%s88] sm:$0xf]
    %v879 = vld [vmem:[%s88 + $0x4] sm:$0xf]
    %v880 = vld [vmem:[%s88 + $0x8] sm:$0xf]
    %v881 = vld [vmem:[%s88 + $0xc] sm:$0xf]
    %v886 = vunpack.c.l.b16 %v878
    %v887 = vunpack.c.l.b16 %v879
    %v888 = vunpack.c.l.b16 %v880
    %v889 = vunpack.c.l.b16 %v881
    %v890 = vpack.c.b16 %v887, %v886
    %v891 = vpack.c.b16 %v889, %v888
    %894 = vmatpush.bf16.msra.mxu0 0
    %895 = vmatpush.bf16.msra.mxu0 0
    %896 = vmatpush.bf16.msra.mxu0 0
    %897 = vmatpush.bf16.msra.mxu0 0
    %898 = vmatpush.bf16.msra.mxu0 0
    %899 = vmatpush.bf16.msra.mxu0 0
    %900 = vmatpush.bf16.msra.mxu0 %v891
    %901 = vmatpush.bf16.msra.mxu0 %v890
    %902 = vmatmul.bf16.gmra.mxu0 %v863
    %v903 = vpop.f32.mrf.mxu0
    %v904 = vadd.f32 0.0, %v903
    %v905 = vpop.f32.mrf.mxu0
    %906 = vdwg.mxu0
    %v907 = vld [vmem:[%s118] sm:$0xf]
    %v908 = vld [vmem:[%s118 + $0x4] sm:$0xf]
    %v909 = vld [vmem:[%s118 + $0x8] sm:$0xf]
    %v910 = vld [vmem:[%s118 + $0xc] sm:$0xf]
    %v915 = vunpack.c.l.b16 %v907
    %v916 = vunpack.c.l.b16 %v908
    %v917 = vunpack.c.l.b16 %v909
    %v918 = vunpack.c.l.b16 %v910
    %v919 = vpack.c.b16 %v916, %v915
    %v920 = vpack.c.b16 %v918, %v917
    %923 = vmatpush.bf16.msra.mxu0 0
    %924 = vmatpush.bf16.msra.mxu0 0
    %925 = vmatpush.bf16.msra.mxu0 0
    %926 = vmatpush.bf16.msra.mxu0 0
    %927 = vmatpush.bf16.msra.mxu0 0
    %928 = vmatpush.bf16.msra.mxu0 0
    %929 = vmatpush.bf16.msra.mxu0 %v920
    %930 = vmatpush.bf16.msra.mxu0 %v919
    %931 = vmatmul.bf16.gmra.mxu0 %v863
    %v932 = vpop.f32.mrf.mxu0
    %v933 = vadd.f32 0.0, %v932
    %v934 = vpop.f32.mrf.mxu0
    %935 = vdwg.mxu0
    %v936 = vld [vmem:[%s148] sm:$0xf]
    %v937 = vld [vmem:[%s148 + $0x4] sm:$0xf]
    %v938 = vld [vmem:[%s148 + $0x8] sm:$0xf]
    %v939 = vld [vmem:[%s148 + $0xc] sm:$0xf]
    %v944 = vunpack.c.l.b16 %v936
    %v945 = vunpack.c.l.b16 %v937
    %v946 = vunpack.c.l.b16 %v938
    %v947 = vunpack.c.l.b16 %v939
    %v948 = vpack.c.b16 %v945, %v944
    %v949 = vpack.c.b16 %v947, %v946
    %952 = vmatpush.bf16.msra.mxu0 0
    %953 = vmatpush.bf16.msra.mxu0 0
    %954 = vmatpush.bf16.msra.mxu0 0
    %955 = vmatpush.bf16.msra.mxu0 0
    %956 = vmatpush.bf16.msra.mxu0 0
    %957 = vmatpush.bf16.msra.mxu0 0
    %958 = vmatpush.bf16.msra.mxu0 %v949
    %959 = vmatpush.bf16.msra.mxu0 %v948
    %960 = vmatmul.bf16.gmra.mxu0 %v863
    %v961 = vpop.f32.mrf.mxu0
    %v962 = vadd.f32 0.0, %v961
    %v963 = vpop.f32.mrf.mxu0
    %964 = vdwg.mxu0
    %s965 = scalar_lea.vmem [#allocation4], 32
    %v966 = vld [vmem:[%s965] sm:$0x3]
    %v967 = vadd.f32 %v966, %v875
    %v968 = vxor.u32 %v967, 2147483648
    %v969 = vmul.f32 %v968, 1.442695
    %v970 = vpow.pop %v969
    %v971 = vadd.f32 %v970, 1.0
    %v972 = vrcp.pop %v971
    %v973 = vmul.f32 %v971, %v972
    %v974 = vsub.f32 1.0, %v973
    %v975 = vmul.f32 %v972, %v974
    %v976 = vadd.f32 %v972, %v975
    %vm977 = vweird.f32 %v971
    %vm978 = vweird.f32 %v972
    %vm979 = vmor %vm977, %vm978
    %v980 = vsel %vm979, %v972, %v976
    %v981 = vand.u32 2147483647, %v971
    %vm982 = vcmp.eq.f32.partialorder %v981, 8.507059e+37
    %v983 = vand.u32 %v971, 2147483648
    %v984 = vor.u32 1.1754944e-38, %v983
    %v985 = vsel %vm982, %v984, %v980
    %v986 = vmul.f32 1.0, %v985
    %s987 = scalar_lea.vmem [#allocation4], 34
    %v988 = vld [vmem:[%s987] sm:$0x3]
    %v989 = vadd.f32 %v988, %v904
    %v990 = vxor.u32 %v989, 2147483648
    %v991 = vmul.f32 %v990, 1.442695
    %v992 = vpow.pop %v991
    %v993 = vadd.f32 %v992, 1.0
    %v994 = vrcp.pop %v993
    %v995 = vmul.f32 %v993, %v994
    %v996 = vsub.f32 1.0, %v995
    %v997 = vmul.f32 %v994, %v996
    %v998 = vadd.f32 %v994, %v997
    %vm999 = vweird.f32 %v993
    %vm1000 = vweird.f32 %v994
    %vm1001 = vmor %vm999, %vm1000
    %v1002 = vsel %vm1001, %v994, %v998
    %v1003 = vand.u32 2147483647, %v993
    %vm1004 = vcmp.eq.f32.partialorder %v1003, 8.507059e+37
    %v1005 = vand.u32 %v993, 2147483648
    %v1006 = vor.u32 1.1754944e-38, %v1005
    %v1007 = vsel %vm1004, %v1006, %v1002
    %v1008 = vmul.f32 1.0, %v1007
    %s1009 = scalar_lea.vmem [#allocation4], 36
    %v1010 = vld [vmem:[%s1009] sm:$0x3]
    %v1011 = vadd.f32 %v1010, %v933
    %v1012 = vtanh.pop %v1011
    %s1013 = scalar_lea.vmem [#allocation4], 38
    %v1014 = vld [vmem:[%s1013] sm:$0x3]
    %v1015 = vadd.f32 %v1014, %v962
    %v1016 = vxor.u32 %v1015, 2147483648
    %v1017 = vmul.f32 %v1016, 1.442695
    %v1018 = vpow.pop %v1017
    %v1019 = vadd.f32 %v1018, 1.0
    %v1020 = vrcp.pop %v1019
    %v1021 = vmul.f32 %v1019, %v1020
    %v1022 = vsub.f32 1.0, %v1021
    %v1023 = vmul.f32 %v1020, %v1022
    %v1024 = vadd.f32 %v1020, %v1023
    %vm1025 = vweird.f32 %v1019
    %vm1026 = vweird.f32 %v1020
    %vm1027 = vmor %vm1025, %vm1026
    %v1028 = vsel %vm1027, %v1020, %v1024
    %v1029 = vand.u32 2147483647, %v1019
    %vm1030 = vcmp.eq.f32.partialorder %v1029, 8.507059e+37
    %v1031 = vand.u32 %v1019, 2147483648
    %v1032 = vor.u32 1.1754944e-38, %v1031
    %v1033 = vsel %vm1030, %v1032, %v1028
    %v1034 = vmul.f32 1.0, %v1033
    %v1035 = vmul.f32 %v1008, %v840
    %v1036 = vmul.f32 %v986, %v1012
    %v1037 = vadd.f32 %v1035, %v1036
    %v1038 = vtanh.pop %v1037
    %v1039 = vmul.f32 %v1034, %v1038
    %s1040 = scalar_lea.vmem [#allocation9], 8
    %1041 = vst.msk [vmem:[%s1040] sm:$0x3] %vm252, %v1039
    %v1042 = vpack.c.bf16 %v1039, %v1039
    %v1043 = vld [vmem:[#allocation7] sm:$0xf]
    %v1044 = vld [vmem:[#allocation7 + $0x4] sm:$0xf]
    %v1045 = vld [vmem:[#allocation7 + $0x8] sm:$0xf]
    %v1046 = vld [vmem:[#allocation7 + $0xc] sm:$0xf]
    %v1051 = vunpack.c.l.b16 %v1043
    %v1052 = vunpack.c.l.b16 %v1044
    %v1053 = vunpack.c.l.b16 %v1045
    %v1054 = vunpack.c.l.b16 %v1046
    %v1055 = vpack.c.b16 %v1052, %v1051
    %v1056 = vpack.c.b16 %v1054, %v1053
    %v1060 = vsel %vm71, %v1042, 0
    %1062 = vmatpush.bf16.msra.mxu0 0
    %1063 = vmatpush.bf16.msra.mxu0 0
    %1064 = vmatpush.bf16.msra.mxu0 0
    %1065 = vmatpush.bf16.msra.mxu0 0
    %1066 = vmatpush.bf16.msra.mxu0 0
    %1067 = vmatpush.bf16.msra.mxu0 0
    %1068 = vmatpush.bf16.msra.mxu0 %v1056
    %1069 = vmatpush.bf16.msra.mxu0 %v1055
    %1070 = vmatmul.bf16.gmra.mxu0 %v1060
    %v1071 = vpop.f32.mrf.mxu0
    %v1072 = vadd.f32 0.0, %v1071
    %v1073 = vpop.f32.mrf.mxu0
    %1074 = vdwg.mxu0
    %v1075 = vld [vmem:[%s88] sm:$0xf]
    %v1076 = vld [vmem:[%s88 + $0x4] sm:$0xf]
    %v1077 = vld [vmem:[%s88 + $0x8] sm:$0xf]
    %v1078 = vld [vmem:[%s88 + $0xc] sm:$0xf]
    %v1083 = vunpack.c.l.b16 %v1075
    %v1084 = vunpack.c.l.b16 %v1076
    %v1085 = vunpack.c.l.b16 %v1077
    %v1086 = vunpack.c.l.b16 %v1078
    %v1087 = vpack.c.b16 %v1084, %v1083
    %v1088 = vpack.c.b16 %v1086, %v1085
    %1091 = vmatpush.bf16.msra.mxu0 0
    %1092 = vmatpush.bf16.msra.mxu0 0
    %1093 = vmatpush.bf16.msra.mxu0 0
    %1094 = vmatpush.bf16.msra.mxu0 0
    %1095 = vmatpush.bf16.msra.mxu0 0
    %1096 = vmatpush.bf16.msra.mxu0 0
    %1097 = vmatpush.bf16.msra.mxu0 %v1088
    %1098 = vmatpush.bf16.msra.mxu0 %v1087
    %1099 = vmatmul.bf16.gmra.mxu0 %v1060
    %v1100 = vpop.f32.mrf.mxu0
    %v1101 = vadd.f32 0.0, %v1100
    %v1102 = vpop.f32.mrf.mxu0
    %1103 = vdwg.mxu0
    %v1104 = vld [vmem:[%s118] sm:$0xf]
    %v1105 = vld [vmem:[%s118 + $0x4] sm:$0xf]
    %v1106 = vld [vmem:[%s118 + $0x8] sm:$0xf]
    %v1107 = vld [vmem:[%s118 + $0xc] sm:$0xf]
    %v1112 = vunpack.c.l.b16 %v1104
    %v1113 = vunpack.c.l.b16 %v1105
    %v1114 = vunpack.c.l.b16 %v1106
    %v1115 = vunpack.c.l.b16 %v1107
    %v1116 = vpack.c.b16 %v1113, %v1112
    %v1117 = vpack.c.b16 %v1115, %v1114
    %1120 = vmatpush.bf16.msra.mxu0 0
    %1121 = vmatpush.bf16.msra.mxu0 0
    %1122 = vmatpush.bf16.msra.mxu0 0
    %1123 = vmatpush.bf16.msra.mxu0 0
    %1124 = vmatpush.bf16.msra.mxu0 0
    %1125 = vmatpush.bf16.msra.mxu0 0
    %1126 = vmatpush.bf16.msra.mxu0 %v1117
    %1127 = vmatpush.bf16.msra.mxu0 %v1116
    %1128 = vmatmul.bf16.gmra.mxu0 %v1060
    %v1129 = vpop.f32.mrf.mxu0
    %v1130 = vadd.f32 0.0, %v1129
    %v1131 = vpop.f32.mrf.mxu0
    %1132 = vdwg.mxu0
    %v1133 = vld [vmem:[%s148] sm:$0xf]
    %v1134 = vld [vmem:[%s148 + $0x4] sm:$0xf]
    %v1135 = vld [vmem:[%s148 + $0x8] sm:$0xf]
    %v1136 = vld [vmem:[%s148 + $0xc] sm:$0xf]
    %v1141 = vunpack.c.l.b16 %v1133
    %v1142 = vunpack.c.l.b16 %v1134
    %v1143 = vunpack.c.l.b16 %v1135
    %v1144 = vunpack.c.l.b16 %v1136
    %v1145 = vpack.c.b16 %v1142, %v1141
    %v1146 = vpack.c.b16 %v1144, %v1143
    %1149 = vmatpush.bf16.msra.mxu0 0
    %1150 = vmatpush.bf16.msra.mxu0 0
    %1151 = vmatpush.bf16.msra.mxu0 0
    %1152 = vmatpush.bf16.msra.mxu0 0
    %1153 = vmatpush.bf16.msra.mxu0 0
    %1154 = vmatpush.bf16.msra.mxu0 0
    %1155 = vmatpush.bf16.msra.mxu0 %v1146
    %1156 = vmatpush.bf16.msra.mxu0 %v1145
    %1157 = vmatmul.bf16.gmra.mxu0 %v1060
    %v1158 = vpop.f32.mrf.mxu0
    %v1159 = vadd.f32 0.0, %v1158
    %v1160 = vpop.f32.mrf.mxu0
    %1161 = vdwg.mxu0
    %s1162 = scalar_lea.vmem [#allocation4], 40
    %v1163 = vld [vmem:[%s1162] sm:$0x3]
    %v1164 = vadd.f32 %v1163, %v1072
    %v1165 = vxor.u32 %v1164, 2147483648
    %v1166 = vmul.f32 %v1165, 1.442695
    %v1167 = vpow.pop %v1166
    %v1168 = vadd.f32 %v1167, 1.0
    %v1169 = vrcp.pop %v1168
    %v1170 = vmul.f32 %v1168, %v1169
    %v1171 = vsub.f32 1.0, %v1170
    %v1172 = vmul.f32 %v1169, %v1171
    %v1173 = vadd.f32 %v1169, %v1172
    %vm1174 = vweird.f32 %v1168
    %vm1175 = vweird.f32 %v1169
    %vm1176 = vmor %vm1174, %vm1175
    %v1177 = vsel %vm1176, %v1169, %v1173
    %v1178 = vand.u32 2147483647, %v1168
    %vm1179 = vcmp.eq.f32.partialorder %v1178, 8.507059e+37
    %v1180 = vand.u32 %v1168, 2147483648
    %v1181 = vor.u32 1.1754944e-38, %v1180
    %v1182 = vsel %vm1179, %v1181, %v1177
    %v1183 = vmul.f32 1.0, %v1182
    %s1184 = scalar_lea.vmem [#allocation4], 42
    %v1185 = vld [vmem:[%s1184] sm:$0x3]
    %v1186 = vadd.f32 %v1185, %v1101
    %v1187 = vxor.u32 %v1186, 2147483648
    %v1188 = vmul.f32 %v1187, 1.442695
    %v1189 = vpow.pop %v1188
    %v1190 = vadd.f32 %v1189, 1.0
    %v1191 = vrcp.pop %v1190
    %v1192 = vmul.f32 %v1190, %v1191
    %v1193 = vsub.f32 1.0, %v1192
    %v1194 = vmul.f32 %v1191, %v1193
    %v1195 = vadd.f32 %v1191, %v1194
    %vm1196 = vweird.f32 %v1190
    %vm1197 = vweird.f32 %v1191
    %vm1198 = vmor %vm1196, %vm1197
    %v1199 = vsel %vm1198, %v1191, %v1195
    %v1200 = vand.u32 2147483647, %v1190
    %vm1201 = vcmp.eq.f32.partialorder %v1200, 8.507059e+37
    %v1202 = vand.u32 %v1190, 2147483648
    %v1203 = vor.u32 1.1754944e-38, %v1202
    %v1204 = vsel %vm1201, %v1203, %v1199
    %v1205 = vmul.f32 1.0, %v1204
    %s1206 = scalar_lea.vmem [#allocation4], 44
    %v1207 = vld [vmem:[%s1206] sm:$0x3]
    %v1208 = vadd.f32 %v1207, %v1130
    %v1209 = vtanh.pop %v1208
    %s1210 = scalar_lea.vmem [#allocation4], 46
    %v1211 = vld [vmem:[%s1210] sm:$0x3]
    %v1212 = vadd.f32 %v1211, %v1159
    %v1213 = vxor.u32 %v1212, 2147483648
    %v1214 = vmul.f32 %v1213, 1.442695
    %v1215 = vpow.pop %v1214
    %v1216 = vadd.f32 %v1215, 1.0
    %v1217 = vrcp.pop %v1216
    %v1218 = vmul.f32 %v1216, %v1217
    %v1219 = vsub.f32 1.0, %v1218
    %v1220 = vmul.f32 %v1217, %v1219
    %v1221 = vadd.f32 %v1217, %v1220
    %vm1222 = vweird.f32 %v1216
    %vm1223 = vweird.f32 %v1217
    %vm1224 = vmor %vm1222, %vm1223
    %v1225 = vsel %vm1224, %v1217, %v1221
    %v1226 = vand.u32 2147483647, %v1216
    %vm1227 = vcmp.eq.f32.partialorder %v1226, 8.507059e+37
    %v1228 = vand.u32 %v1216, 2147483648
    %v1229 = vor.u32 1.1754944e-38, %v1228
    %v1230 = vsel %vm1227, %v1229, %v1225
    %v1231 = vmul.f32 1.0, %v1230
    %v1232 = vmul.f32 %v1205, %v1037
    %v1233 = vmul.f32 %v1183, %v1209
    %v1234 = vadd.f32 %v1232, %v1233
    %v1235 = vtanh.pop %v1234
    %v1236 = vmul.f32 %v1231, %v1235
    %s1237 = scalar_lea.vmem [#allocation9], 10
    %1238 = vst.msk [vmem:[%s1237] sm:$0x3] %vm252, %v1236
    %v1239 = vpack.c.bf16 %v1236, %v1236
    %v1240 = vld [vmem:[#allocation7] sm:$0xf]
    %v1241 = vld [vmem:[#allocation7 + $0x4] sm:$0xf]
    %v1242 = vld [vmem:[#allocation7 + $0x8] sm:$0xf]
    %v1243 = vld [vmem:[#allocation7 + $0xc] sm:$0xf]
    %v1248 = vunpack.c.l.b16 %v1240
    %v1249 = vunpack.c.l.b16 %v1241
    %v1250 = vunpack.c.l.b16 %v1242
    %v1251 = vunpack.c.l.b16 %v1243
    %v1252 = vpack.c.b16 %v1249, %v1248
    %v1253 = vpack.c.b16 %v1251, %v1250
    %v1257 = vsel %vm71, %v1239, 0
    %1259 = vmatpush.bf16.msra.mxu0 0
    %1260 = vmatpush.bf16.msra.mxu0 0
    %1261 = vmatpush.bf16.msra.mxu0 0
    %1262 = vmatpush.bf16.msra.mxu0 0
    %1263 = vmatpush.bf16.msra.mxu0 0
    %1264 = vmatpush.bf16.msra.mxu0 0
    %1265 = vmatpush.bf16.msra.mxu0 %v1253
    %1266 = vmatpush.bf16.msra.mxu0 %v1252
    %1267 = vmatmul.bf16.gmra.mxu0 %v1257
    %v1268 = vpop.f32.mrf.mxu0
    %v1269 = vadd.f32 0.0, %v1268
    %v1270 = vpop.f32.mrf.mxu0
    %1271 = vdwg.mxu0
    %v1272 = vld [vmem:[%s88] sm:$0xf]
    %v1273 = vld [vmem:[%s88 + $0x4] sm:$0xf]
    %v1274 = vld [vmem:[%s88 + $0x8] sm:$0xf]
    %v1275 = vld [vmem:[%s88 + $0xc] sm:$0xf]
    %v1280 = vunpack.c.l.b16 %v1272
    %v1281 = vunpack.c.l.b16 %v1273
    %v1282 = vunpack.c.l.b16 %v1274
    %v1283 = vunpack.c.l.b16 %v1275
    %v1284 = vpack.c.b16 %v1281, %v1280
    %v1285 = vpack.c.b16 %v1283, %v1282
    %1288 = vmatpush.bf16.msra.mxu0 0
    %1289 = vmatpush.bf16.msra.mxu0 0
    %1290 = vmatpush.bf16.msra.mxu0 0
    %1291 = vmatpush.bf16.msra.mxu0 0
    %1292 = vmatpush.bf16.msra.mxu0 0
    %1293 = vmatpush.bf16.msra.mxu0 0
    %1294 = vmatpush.bf16.msra.mxu0 %v1285
    %1295 = vmatpush.bf16.msra.mxu0 %v1284
    %1296 = vmatmul.bf16.gmra.mxu0 %v1257
    %v1297 = vpop.f32.mrf.mxu0
    %v1298 = vadd.f32 0.0, %v1297
    %v1299 = vpop.f32.mrf.mxu0
    %1300 = vdwg.mxu0
    %v1301 = vld [vmem:[%s118] sm:$0xf]
    %v1302 = vld [vmem:[%s118 + $0x4] sm:$0xf]
    %v1303 = vld [vmem:[%s118 + $0x8] sm:$0xf]
    %v1304 = vld [vmem:[%s118 + $0xc] sm:$0xf]
    %v1309 = vunpack.c.l.b16 %v1301
    %v1310 = vunpack.c.l.b16 %v1302
    %v1311 = vunpack.c.l.b16 %v1303
    %v1312 = vunpack.c.l.b16 %v1304
    %v1313 = vpack.c.b16 %v1310, %v1309
    %v1314 = vpack.c.b16 %v1312, %v1311
    %1317 = vmatpush.bf16.msra.mxu0 0
    %1318 = vmatpush.bf16.msra.mxu0 0
    %1319 = vmatpush.bf16.msra.mxu0 0
    %1320 = vmatpush.bf16.msra.mxu0 0
    %1321 = vmatpush.bf16.msra.mxu0 0
    %1322 = vmatpush.bf16.msra.mxu0 0
    %1323 = vmatpush.bf16.msra.mxu0 %v1314
    %1324 = vmatpush.bf16.msra.mxu0 %v1313
    %1325 = vmatmul.bf16.gmra.mxu0 %v1257
    %v1326 = vpop.f32.mrf.mxu0
    %v1327 = vadd.f32 0.0, %v1326
    %v1328 = vpop.f32.mrf.mxu0
    %1329 = vdwg.mxu0
    %v1330 = vld [vmem:[%s148] sm:$0xf]
    %v1331 = vld [vmem:[%s148 + $0x4] sm:$0xf]
    %v1332 = vld [vmem:[%s148 + $0x8] sm:$0xf]
    %v1333 = vld [vmem:[%s148 + $0xc] sm:$0xf]
    %v1338 = vunpack.c.l.b16 %v1330
    %v1339 = vunpack.c.l.b16 %v1331
    %v1340 = vunpack.c.l.b16 %v1332
    %v1341 = vunpack.c.l.b16 %v1333
    %v1342 = vpack.c.b16 %v1339, %v1338
    %v1343 = vpack.c.b16 %v1341, %v1340
    %1346 = vmatpush.bf16.msra.mxu0 0
    %1347 = vmatpush.bf16.msra.mxu0 0
    %1348 = vmatpush.bf16.msra.mxu0 0
    %1349 = vmatpush.bf16.msra.mxu0 0
    %1350 = vmatpush.bf16.msra.mxu0 0
    %1351 = vmatpush.bf16.msra.mxu0 0
    %1352 = vmatpush.bf16.msra.mxu0 %v1343
    %1353 = vmatpush.bf16.msra.mxu0 %v1342
    %1354 = vmatmul.bf16.gmra.mxu0 %v1257
    %v1355 = vpop.f32.mrf.mxu0
    %v1356 = vadd.f32 0.0, %v1355
    %v1357 = vpop.f32.mrf.mxu0
    %1358 = vdwg.mxu0
    %s1359 = scalar_lea.vmem [#allocation4], 48
    %v1360 = vld [vmem:[%s1359] sm:$0x3]
    %v1361 = vadd.f32 %v1360, %v1269
    %v1362 = vxor.u32 %v1361, 2147483648
    %v1363 = vmul.f32 %v1362, 1.442695
    %v1364 = vpow.pop %v1363
    %v1365 = vadd.f32 %v1364, 1.0
    %v1366 = vrcp.pop %v1365
    %v1367 = vmul.f32 %v1365, %v1366
    %v1368 = vsub.f32 1.0, %v1367
    %v1369 = vmul.f32 %v1366, %v1368
    %v1370 = vadd.f32 %v1366, %v1369
    %vm1371 = vweird.f32 %v1365
    %vm1372 = vweird.f32 %v1366
    %vm1373 = vmor %vm1371, %vm1372
    %v1374 = vsel %vm1373, %v1366, %v1370
    %v1375 = vand.u32 2147483647, %v1365
    %vm1376 = vcmp.eq.f32.partialorder %v1375, 8.507059e+37
    %v1377 = vand.u32 %v1365, 2147483648
    %v1378 = vor.u32 1.1754944e-38, %v1377
    %v1379 = vsel %vm1376, %v1378, %v1374
    %v1380 = vmul.f32 1.0, %v1379
    %s1381 = scalar_lea.vmem [#allocation4], 50
    %v1382 = vld [vmem:[%s1381] sm:$0x3]
    %v1383 = vadd.f32 %v1382, %v1298
    %v1384 = vxor.u32 %v1383, 2147483648
    %v1385 = vmul.f32 %v1384, 1.442695
    %v1386 = vpow.pop %v1385
    %v1387 = vadd.f32 %v1386, 1.0
    %v1388 = vrcp.pop %v1387
    %v1389 = vmul.f32 %v1387, %v1388
    %v1390 = vsub.f32 1.0, %v1389
    %v1391 = vmul.f32 %v1388, %v1390
    %v1392 = vadd.f32 %v1388, %v1391
    %vm1393 = vweird.f32 %v1387
    %vm1394 = vweird.f32 %v1388
    %vm1395 = vmor %vm1393, %vm1394
    %v1396 = vsel %vm1395, %v1388, %v1392
    %v1397 = vand.u32 2147483647, %v1387
    %vm1398 = vcmp.eq.f32.partialorder %v1397, 8.507059e+37
    %v1399 = vand.u32 %v1387, 2147483648
    %v1400 = vor.u32 1.1754944e-38, %v1399
    %v1401 = vsel %vm1398, %v1400, %v1396
    %v1402 = vmul.f32 1.0, %v1401
    %s1403 = scalar_lea.vmem [#allocation4], 52
    %v1404 = vld [vmem:[%s1403] sm:$0x3]
    %v1405 = vadd.f32 %v1404, %v1327
    %v1406 = vtanh.pop %v1405
    %s1407 = scalar_lea.vmem [#allocation4], 54
    %v1408 = vld [vmem:[%s1407] sm:$0x3]
    %v1409 = vadd.f32 %v1408, %v1356
    %v1410 = vxor.u32 %v1409, 2147483648
    %v1411 = vmul.f32 %v1410, 1.442695
    %v1412 = vpow.pop %v1411
    %v1413 = vadd.f32 %v1412, 1.0
    %v1414 = vrcp.pop %v1413
    %v1415 = vmul.f32 %v1413, %v1414
    %v1416 = vsub.f32 1.0, %v1415
    %v1417 = vmul.f32 %v1414, %v1416
    %v1418 = vadd.f32 %v1414, %v1417
    %vm1419 = vweird.f32 %v1413
    %vm1420 = vweird.f32 %v1414
    %vm1421 = vmor %vm1419, %vm1420
    %v1422 = vsel %vm1421, %v1414, %v1418
    %v1423 = vand.u32 2147483647, %v1413
    %vm1424 = vcmp.eq.f32.partialorder %v1423, 8.507059e+37
    %v1425 = vand.u32 %v1413, 2147483648
    %v1426 = vor.u32 1.1754944e-38, %v1425
    %v1427 = vsel %vm1424, %v1426, %v1422
    %v1428 = vmul.f32 1.0, %v1427
    %v1429 = vmul.f32 %v1402, %v1234
    %v1430 = vmul.f32 %v1380, %v1406
    %v1431 = vadd.f32 %v1429, %v1430
    %v1432 = vtanh.pop %v1431
    %v1433 = vmul.f32 %v1428, %v1432
    %s1434 = scalar_lea.vmem [#allocation9], 12
    %1435 = vst.msk [vmem:[%s1434] sm:$0x3] %vm252, %v1433
    %v1436 = vpack.c.bf16 %v1433, %v1433
    %v1437 = vld [vmem:[#allocation7] sm:$0xf]
    %v1438 = vld [vmem:[#allocation7 + $0x4] sm:$0xf]
    %v1439 = vld [vmem:[#allocation7 + $0x8] sm:$0xf]
    %v1440 = vld [vmem:[#allocation7 + $0xc] sm:$0xf]
    %v1445 = vunpack.c.l.b16 %v1437
    %v1446 = vunpack.c.l.b16 %v1438
    %v1447 = vunpack.c.l.b16 %v1439
    %v1448 = vunpack.c.l.b16 %v1440
    %v1449 = vpack.c.b16 %v1446, %v1445
    %v1450 = vpack.c.b16 %v1448, %v1447
    %v1454 = vsel %vm71, %v1436, 0
    %1456 = vmatpush.bf16.msra.mxu0 0
    %1457 = vmatpush.bf16.msra.mxu0 0
    %1458 = vmatpush.bf16.msra.mxu0 0
    %1459 = vmatpush.bf16.msra.mxu0 0
    %1460 = vmatpush.bf16.msra.mxu0 0
    %1461 = vmatpush.bf16.msra.mxu0 0
    %1462 = vmatpush.bf16.msra.mxu0 %v1450
    %1463 = vmatpush.bf16.msra.mxu0 %v1449
    %1464 = vmatmul.bf16.gmra.mxu0 %v1454
    %v1465 = vpop.f32.mrf.mxu0
    %v1466 = vadd.f32 0.0, %v1465
    %v1467 = vpop.f32.mrf.mxu0
    %1468 = vdwg.mxu0
    %v1469 = vld [vmem:[%s88] sm:$0xf]
    %v1470 = vld [vmem:[%s88 + $0x4] sm:$0xf]
    %v1471 = vld [vmem:[%s88 + $0x8] sm:$0xf]
    %v1472 = vld [vmem:[%s88 + $0xc] sm:$0xf]
    %v1477 = vunpack.c.l.b16 %v1469
    %v1478 = vunpack.c.l.b16 %v1470
    %v1479 = vunpack.c.l.b16 %v1471
    %v1480 = vunpack.c.l.b16 %v1472
    %v1481 = vpack.c.b16 %v1478, %v1477
    %v1482 = vpack.c.b16 %v1480, %v1479
    %1485 = vmatpush.bf16.msra.mxu0 0
    %1486 = vmatpush.bf16.msra.mxu0 0
    %1487 = vmatpush.bf16.msra.mxu0 0
    %1488 = vmatpush.bf16.msra.mxu0 0
    %1489 = vmatpush.bf16.msra.mxu0 0
    %1490 = vmatpush.bf16.msra.mxu0 0
    %1491 = vmatpush.bf16.msra.mxu0 %v1482
    %1492 = vmatpush.bf16.msra.mxu0 %v1481
    %1493 = vmatmul.bf16.gmra.mxu0 %v1454
    %v1494 = vpop.f32.mrf.mxu0
    %v1495 = vadd.f32 0.0, %v1494
    %v1496 = vpop.f32.mrf.mxu0
    %1497 = vdwg.mxu0
    %v1498 = vld [vmem:[%s118] sm:$0xf]
    %v1499 = vld [vmem:[%s118 + $0x4] sm:$0xf]
    %v1500 = vld [vmem:[%s118 + $0x8] sm:$0xf]
    %v1501 = vld [vmem:[%s118 + $0xc] sm:$0xf]
    %v1506 = vunpack.c.l.b16 %v1498
    %v1507 = vunpack.c.l.b16 %v1499
    %v1508 = vunpack.c.l.b16 %v1500
    %v1509 = vunpack.c.l.b16 %v1501
    %v1510 = vpack.c.b16 %v1507, %v1506
    %v1511 = vpack.c.b16 %v1509, %v1508
    %1514 = vmatpush.bf16.msra.mxu0 0
    %1515 = vmatpush.bf16.msra.mxu0 0
    %1516 = vmatpush.bf16.msra.mxu0 0
    %1517 = vmatpush.bf16.msra.mxu0 0
    %1518 = vmatpush.bf16.msra.mxu0 0
    %1519 = vmatpush.bf16.msra.mxu0 0
    %1520 = vmatpush.bf16.msra.mxu0 %v1511
    %1521 = vmatpush.bf16.msra.mxu0 %v1510
    %1522 = vmatmul.bf16.gmra.mxu0 %v1454
    %v1523 = vpop.f32.mrf.mxu0
    %v1524 = vadd.f32 0.0, %v1523
    %v1525 = vpop.f32.mrf.mxu0
    %1526 = vdwg.mxu0
    %v1527 = vld [vmem:[%s148] sm:$0xf]
    %v1528 = vld [vmem:[%s148 + $0x4] sm:$0xf]
    %v1529 = vld [vmem:[%s148 + $0x8] sm:$0xf]
    %v1530 = vld [vmem:[%s148 + $0xc] sm:$0xf]
    %v1535 = vunpack.c.l.b16 %v1527
    %v1536 = vunpack.c.l.b16 %v1528
    %v1537 = vunpack.c.l.b16 %v1529
    %v1538 = vunpack.c.l.b16 %v1530
    %v1539 = vpack.c.b16 %v1536, %v1535
    %v1540 = vpack.c.b16 %v1538, %v1537
    %1543 = vmatpush.bf16.msra.mxu0 0
    %1544 = vmatpush.bf16.msra.mxu0 0
    %1545 = vmatpush.bf16.msra.mxu0 0
    %1546 = vmatpush.bf16.msra.mxu0 0
    %1547 = vmatpush.bf16.msra.mxu0 0
    %1548 = vmatpush.bf16.msra.mxu0 0
    %1549 = vmatpush.bf16.msra.mxu0 %v1540
    %1550 = vmatpush.bf16.msra.mxu0 %v1539
    %1551 = vmatmul.bf16.gmra.mxu0 %v1454
    %v1552 = vpop.f32.mrf.mxu0
    %v1553 = vadd.f32 0.0, %v1552
    %v1554 = vpop.f32.mrf.mxu0
    %1555 = vdwg.mxu0
    %s1556 = scalar_lea.vmem [#allocation4], 56
    %v1557 = vld [vmem:[%s1556] sm:$0x3]
    %v1558 = vadd.f32 %v1557, %v1466
    %v1559 = vxor.u32 %v1558, 2147483648
    %v1560 = vmul.f32 %v1559, 1.442695
    %v1561 = vpow.pop %v1560
    %v1562 = vadd.f32 %v1561, 1.0
    %v1563 = vrcp.pop %v1562
    %v1564 = vmul.f32 %v1562, %v1563
    %v1565 = vsub.f32 1.0, %v1564
    %v1566 = vmul.f32 %v1563, %v1565
    %v1567 = vadd.f32 %v1563, %v1566
    %vm1568 = vweird.f32 %v1562
    %vm1569 = vweird.f32 %v1563
    %vm1570 = vmor %vm1568, %vm1569
    %v1571 = vsel %vm1570, %v1563, %v1567
    %v1572 = vand.u32 2147483647, %v1562
    %vm1573 = vcmp.eq.f32.partialorder %v1572, 8.507059e+37
    %v1574 = vand.u32 %v1562, 2147483648
    %v1575 = vor.u32 1.1754944e-38, %v1574
    %v1576 = vsel %vm1573, %v1575, %v1571
    %v1577 = vmul.f32 1.0, %v1576
    %s1578 = scalar_lea.vmem [#allocation4], 58
    %v1579 = vld [vmem:[%s1578] sm:$0x3]
    %v1580 = vadd.f32 %v1579, %v1495
    %v1581 = vxor.u32 %v1580, 2147483648
    %v1582 = vmul.f32 %v1581, 1.442695
    %v1583 = vpow.pop %v1582
    %v1584 = vadd.f32 %v1583, 1.0
    %v1585 = vrcp.pop %v1584
    %v1586 = vmul.f32 %v1584, %v1585
    %v1587 = vsub.f32 1.0, %v1586
    %v1588 = vmul.f32 %v1585, %v1587
    %v1589 = vadd.f32 %v1585, %v1588
    %vm1590 = vweird.f32 %v1584
    %vm1591 = vweird.f32 %v1585
    %vm1592 = vmor %vm1590, %vm1591
    %v1593 = vsel %vm1592, %v1585, %v1589
    %v1594 = vand.u32 2147483647, %v1584
    %vm1595 = vcmp.eq.f32.partialorder %v1594, 8.507059e+37
    %v1596 = vand.u32 %v1584, 2147483648
    %v1597 = vor.u32 1.1754944e-38, %v1596
    %v1598 = vsel %vm1595, %v1597, %v1593
    %v1599 = vmul.f32 1.0, %v1598
    %s1600 = scalar_lea.vmem [#allocation4], 60
    %v1601 = vld [vmem:[%s1600] sm:$0x3]
    %v1602 = vadd.f32 %v1601, %v1524
    %v1603 = vtanh.pop %v1602
    %s1604 = scalar_lea.vmem [#allocation4], 62
    %v1605 = vld [vmem:[%s1604] sm:$0x3]
    %v1606 = vadd.f32 %v1605, %v1553
    %v1607 = vxor.u32 %v1606, 2147483648
    %v1608 = vmul.f32 %v1607, 1.442695
    %v1609 = vpow.pop %v1608
    %v1610 = vadd.f32 %v1609, 1.0
    %v1611 = vrcp.pop %v1610
    %v1612 = vmul.f32 %v1610, %v1611
    %v1613 = vsub.f32 1.0, %v1612
    %v1614 = vmul.f32 %v1611, %v1613
    %v1615 = vadd.f32 %v1611, %v1614
    %vm1616 = vweird.f32 %v1610
    %vm1617 = vweird.f32 %v1611
    %vm1618 = vmor %vm1616, %vm1617
    %v1619 = vsel %vm1618, %v1611, %v1615
    %v1620 = vand.u32 2147483647, %v1610
    %vm1621 = vcmp.eq.f32.partialorder %v1620, 8.507059e+37
    %v1622 = vand.u32 %v1610, 2147483648
    %v1623 = vor.u32 1.1754944e-38, %v1622
    %v1624 = vsel %vm1621, %v1623, %v1619
    %v1625 = vmul.f32 1.0, %v1624
    %v1626 = vmul.f32 %v1599, %v1431
    %v1627 = vmul.f32 %v1577, %v1603
    %v1628 = vadd.f32 %v1626, %v1627
    %v1629 = vtanh.pop %v1628
    %v1630 = vmul.f32 %v1625, %v1629
    %s1631 = scalar_lea.vmem [#allocation9], 14
    %1632 = vst.msk [vmem:[%s1631] sm:$0x3] %vm252, %v1630
    %1633 = vst.msk [vmem:[#allocation2] sm:$0x3] %vm252, %v1630
    %1634 = vst.msk [vmem:[#allocation3] sm:$0x3] %vm252, %v1628
    // Predicated region
    $region22: #{tpu_custom_call.1} parent=1 // pred_check
      _
    $region23: #{tpu_custom_call.1} parent=1 // pred_check_branch
      %1636 = sbr.rel (0) target = $region25
    $region24: #{tpu_custom_call.1} parent=1 // pred_region
      %1638 = vsyncadd [#allocation6], 0
      %s1639 = sshll.u32 [#allocation9], 4
      %s1640 = int_to_ptr.vmem [resolvable:$true] %s1639
      %s1641 = sshll.u32 %s2, 4
      %s1642 = int_to_ptr.hbm [resolvable:$true] %s1641
      %1647 = dma.vmem_to_hbm [thread:$0]  %s1640, 256, %s1642, [#allocation6], 32, 32, 2
    $region25: #{tpu_custom_call.1} parent=1 // pred_fallthru
      _
    // Predicated region
    $region26: #{tpu_custom_call.1} parent=1 // pred_check
      _
    $region27: #{tpu_custom_call.1} parent=1 // pred_check_branch
      %1649 = sbr.rel (0) target = $region29
    $region28: #{tpu_custom_call.1} parent=1 // pred_region
      %1651 = dma.done [#allocation6], 256
    $region29: #{tpu_custom_call.1} parent=1 // pred_fallthru
      _
    %1652 = vsyncpa [#allocation5], 1
    %1653 = vsyncpa [#allocation8], 1
    %1654 = vsyncpa [#allocation6], 1

</llo_original>
